<compile_context>
chip_gen: v5e
topology: v5e:2x2
jax: 0.10.0
libtpu: 0.0.40
codegen_flags: <defaults>
</compile_context>

<pallas_src>
import jax
import jax.numpy as jnp
from jax.experimental import pallas as pl
from jax.experimental.pallas import tpu as pltpu

EPS = 1e-5
LANE = 128


def _gnn_kernel(at_ref, xt_ref,
                w1t_ref, b1_ref,
                w2t_ref, c2_ref, b2_ref,
                w3t_ref, c3_ref, b3_ref,
                w4t_ref, c4_ref, b4_ref,
                out_ref,
                at_vmem, at_sem):
    # Stream A_hat^T HBM -> VMEM; overlapped with layer 1's projection below.
    at_copy = pltpu.make_async_copy(at_ref, at_vmem, at_sem)
    at_copy.start()

    n_nodes = xt_ref.shape[1]
    inv_n = 1.0 / n_nodes

    def project(h_t, wt_ref, c_ref=None):
        # hw^T = W'^T @ h^T (+ c): bf16 MXU operands, fp32 accumulation.
        hw = jnp.dot(wt_ref[...], h_t.astype(jnp.bfloat16),
                     preferred_element_type=jnp.float32)
        if c_ref is not None:
            hw = hw + c_ref[...]              # folded BN-beta pre-bias
        return hw.astype(jnp.bfloat16)

    def aggregate_relu(hw_t, b_ref):
        # (A_hat @ hw)^T = hw^T @ A_hat^T; output width = N lanes, so the
        # dominant N^2 matmul fills the full 256-wide MXU on v6e/v7x.
        agg = jnp.dot(hw_t, at_vmem[...], preferred_element_type=jnp.float32)
        return jnp.maximum(agg + b_ref[...], 0.0)

    def normalize(h_t):
        # Train-mode BatchNorm core (biased variance) over the node (lane)
        # axis, two-pass mean/var; gamma/beta are folded into the next layer.
        mean = jnp.sum(h_t, axis=1, keepdims=True) * inv_n
        cen = h_t - mean
        var = jnp.sum(cen * cen, axis=1, keepdims=True) * inv_n
        return cen * jax.lax.rsqrt(var + EPS)

    hw1 = project(xt_ref[...], w1t_ref)       # does not need A -> overlaps DMA
    at_copy.wait()

    h = normalize(aggregate_relu(hw1, b1_ref))
    h = normalize(aggregate_relu(project(h, w2t_ref, c2_ref), b2_ref))
    h = normalize(aggregate_relu(project(h, w3t_ref, c3_ref), b3_ref))
    out_ref[...] = aggregate_relu(project(h, w4t_ref, c4_ref), b4_ref)


def build_norm_adj(edge_index, num_nodes):
    """Dense D^-1/2 (A + I) D^-1/2, matching torch_geometric gcn_norm with
    add_remaining_self_loops (existing self-loops replaced by weight-1)."""
    src = edge_index[0]
    dst = edge_index[1]
    w = jnp.where(src != dst, 1.0, 0.0).astype(jnp.float32)   # drop self-loops
    a = jnp.zeros((num_nodes, num_nodes), jnp.float32).at[dst, src].add(w)
    a = a + jnp.eye(num_nodes, dtype=jnp.float32)             # one self-loop/node
    deg = a.sum(axis=1)
    dinv = jnp.where(deg > 0, jax.lax.rsqrt(deg), 0.0)
    return (dinv[:, None] * a) * dinv[None, :]


def _pad_to(arr, shape):
    return jnp.pad(arr, [(0, t - s) for s, t in zip(arr.shape, shape)])


def gnn_forward(x, edge_index, params):
    n, in_ch = x.shape
    hidden = params["w1"].shape[1]
    out_ch = params["w4"].shape[1]
    assert max(in_ch, hidden, out_ch) <= LANE, "feature dims must fit one lane tile"

    # A_hat^T in bf16 (kernel computes (A_hat @ hw)^T = hw^T @ A_hat^T).
    a_hat_t = build_norm_adj(edge_index, n).T.astype(jnp.bfloat16)

    # Fold BN_i affine into layer i+1: (h*g + be) @ W = h @ (diag(g)@W) + be@W.
    # Feature-major (transposed) forms: W'^T = W^T diag(g),  c = W^T be.
    def wt(w, g=None):
        wt_ = w.T if g is None else (w * g[:, None]).T
        return _pad_to(wt_, (LANE, LANE)).astype(jnp.bfloat16)

    def col(v):
        return _pad_to(v.reshape(-1, 1), (LANE, 1)).astype(jnp.float32)

    w1t = wt(params["w1"])
    b1 = col(params["b1"])
    w2t = wt(params["w2"], params["g1"])
    c2 = col(params["w2"].T @ params["be1"])
    b2 = col(params["b2"])
    w3t = wt(params["w3"], params["g2"])
    c3 = col(params["w3"].T @ params["be2"])
    b3 = col(params["b3"])
    w4t = wt(params["w4"], params["g3"])
    c4 = col(params["w4"].T @ params["be3"])
    b4 = col(params["b4"])

    # Feature-major x, bf16, padded to one 128-row tile (padded rows are zero
    # and provably stay zero through every layer; wrapper slices them off).
    xt = _pad_to(x.T.astype(jnp.bfloat16), (LANE, n))

    args = (a_hat_t, xt,
            w1t, b1,
            w2t, c2, b2,
            w3t, c3, b3,
            w4t, c4, b4)

    # VMEM working set: bf16 A^T scratch + bf16 x + a few fp32 [128, N]
    # activations (incl. output buffer) + bf16 weight tiles + bias columns.
    est_bytes = (n * n * 2 + LANE * n * 2 + 8 * LANE * n * 4
                 + 4 * LANE * LANE * 2 + 16 * LANE * 4)
    try:
        vmem_cap = int(pltpu.get_tpu_info().vmem_capacity_bytes)
    except Exception:
        vmem_cap = 64 << 20                      # conservative fallback
    usable = max(vmem_cap - (24 << 20), vmem_cap // 2)
    vmem_limit = int(min(max(2 * est_bytes, 32 << 20), usable))

    vmem_spec = pl.BlockSpec(memory_space=pltpu.MemorySpace.VMEM)
    out = pl.pallas_call(
        _gnn_kernel,
        out_shape=jax.ShapeDtypeStruct((LANE, n), jnp.float32),
        in_specs=[pl.BlockSpec(memory_space=pl.ANY)]
                 + [vmem_spec] * (len(args) - 1),
        out_specs=vmem_spec,
        scratch_shapes=[pltpu.VMEM((n, n), jnp.bfloat16),
                        pltpu.SemaphoreType.DMA(())],
        compiler_params=pltpu.CompilerParams(vmem_limit_bytes=vmem_limit),
    )(*args)
    # Back to node-major; drop padded feature rows.
    return out[:out_ch, :].T


def init_params(key, in_channels, hidden_channels, out_channels):
    """Deterministic glorot weights, zero biases, unit gamma, zero beta."""
    def glorot(k, fan_in, fan_out):
        lim = jnp.sqrt(6.0 / (fan_in + fan_out))
        return jax.random.uniform(k, (fan_in, fan_out), jnp.float32, -lim, lim)

    ks = jax.random.split(key, 4)
    return {
        "w1": glorot(ks[0], in_channels, hidden_channels),
        "b1": jnp.zeros((hidden_channels,), jnp.float32),
        "w2": glorot(ks[1], hidden_channels, hidden_channels),
        "b2": jnp.zeros((hidden_channels,), jnp.float32),
        "w3": glorot(ks[2], hidden_channels, hidden_channels),
        "b3": jnp.zeros((hidden_channels,), jnp.float32),
        "w4": glorot(ks[3], hidden_channels, out_channels),
        "b4": jnp.zeros((out_channels,), jnp.float32),
        "g1": jnp.ones((hidden_channels,), jnp.float32),
        "be1": jnp.zeros((hidden_channels,), jnp.float32),
        "g2": jnp.ones((hidden_channels,), jnp.float32),
        "be2": jnp.zeros((hidden_channels,), jnp.float32),
        "g3": jnp.ones((hidden_channels,), jnp.float32),
        "be3": jnp.zeros((hidden_channels,), jnp.float32),
    }


if __name__ == "__main__":
    N = 128            # nodes
    IN_CH = 16
    HIDDEN = 32
    OUT_CH = 8
    NUM_EDGES = 256

    key = jax.random.PRNGKey(0)
    k_x, k_e, k_p = jax.random.split(key, 3)

    x = jax.random.normal(k_x, (N, IN_CH), jnp.float32)

    # random undirected edge set (both directions included)
    e_src = jax.random.randint(k_e, (NUM_EDGES,), 0, N, jnp.int32)
    e_dst = jax.random.randint(jax.random.fold_in(k_e, 1), (NUM_EDGES,), 0, N,
                               jnp.int32)
    edge_index = jnp.stack([
        jnp.concatenate([e_src, e_dst]),
        jnp.concatenate([e_dst, e_src]),
    ], axis=0)

    params = init_params(k_p, IN_CH, HIDDEN, OUT_CH)

    out = gnn_forward(x, edge_index, params)
    jax.block_until_ready(out)
    assert out.shape == (N, OUT_CH)
    assert bool(jnp.all(jnp.isfinite(out)))
    print("KERNEL_OK")
</pallas_src>

<mosaic_0001>
module attributes {stable_mosaic.version = 11 : i64} {
  func.func @_gnn_kernel(%arg0: memref<128x128xbf16, #tpu.memory_space<any>>, %arg1: memref<128x128xbf16, #tpu.memory_space<vmem>>, %arg2: memref<128x128xbf16, #tpu.memory_space<vmem>>, %arg3: memref<128x1xf32, #tpu.memory_space<vmem>>, %arg4: memref<128x128xbf16, #tpu.memory_space<vmem>>, %arg5: memref<128x1xf32, #tpu.memory_space<vmem>>, %arg6: memref<128x1xf32, #tpu.memory_space<vmem>>, %arg7: memref<128x128xbf16, #tpu.memory_space<vmem>>, %arg8: memref<128x1xf32, #tpu.memory_space<vmem>>, %arg9: memref<128x1xf32, #tpu.memory_space<vmem>>, %arg10: memref<128x128xbf16, #tpu.memory_space<vmem>>, %arg11: memref<128x1xf32, #tpu.memory_space<vmem>>, %arg12: memref<128x1xf32, #tpu.memory_space<vmem>>, %arg13: memref<128x128xf32, #tpu.memory_space<vmem>>, %arg14: memref<128x128xbf16, #tpu.memory_space<vmem>>, %arg15: memref<!tpu.dma_semaphore, #tpu.memory_space<semaphore_mem>>) attributes {dimension_semantics = [], scalar_prefetch = 0 : i64, scratch_operands = 2 : i64, tpu.core_type = #tpu.core_type<tc>} {
    tpu.enqueue_dma source(%arg0 : memref<128x128xbf16, #tpu.memory_space<any>>) target(%arg14 : memref<128x128xbf16, #tpu.memory_space<vmem>>) target_semaphore(%arg15 : memref<!tpu.dma_semaphore, #tpu.memory_space<semaphore_mem>>)
    %c0 = arith.constant 0 : index
    %c0_0 = arith.constant 0 : index
    %0 = vector.load %arg1[%c0, %c0_0] : memref<128x128xbf16, #tpu.memory_space<vmem>>, vector<128x128xbf16>
    %c0_1 = arith.constant 0 : index
    %c0_2 = arith.constant 0 : index
    %1 = vector.load %arg2[%c0_1, %c0_2] : memref<128x128xbf16, #tpu.memory_space<vmem>>, vector<128x128xbf16>
    %cst = arith.constant dense<0.000000e+00> : vector<128x128xf32>
    %2 = tpu.matmul %1, %0, %cst {dimension_numbers = #tpu.dot_dimension_numbers<[1], [0], [0], [1], [0, 0, 1, 1], [], []>} : vector<128x128xbf16>, vector<128x128xbf16>, vector<128x128xf32> -> vector<128x128xf32>
    %3 = arith.truncf %2 : vector<128x128xf32> to vector<128x128xbf16>
    tpu.wait_dma2 semaphore(%arg15 : memref<!tpu.dma_semaphore, #tpu.memory_space<semaphore_mem>>) src(%arg0 : memref<128x128xbf16, #tpu.memory_space<any>>) dst(%arg14 : memref<128x128xbf16, #tpu.memory_space<vmem>>)
    %c0_3 = arith.constant 0 : index
    %c0_4 = arith.constant 0 : index
    %4 = vector.load %arg14[%c0_3, %c0_4] : memref<128x128xbf16, #tpu.memory_space<vmem>>, vector<128x128xbf16>
    %cst_5 = arith.constant dense<0.000000e+00> : vector<128x128xf32>
    %5 = tpu.matmul %3, %4, %cst_5 {dimension_numbers = #tpu.dot_dimension_numbers<[1], [0], [0], [1], [0, 0, 1, 1], [], []>} : vector<128x128xbf16>, vector<128x128xbf16>, vector<128x128xf32> -> vector<128x128xf32>
    %c0_6 = arith.constant 0 : index
    %c0_7 = arith.constant 0 : index
    %6 = vector.load %arg3[%c0_6, %c0_7] : memref<128x1xf32, #tpu.memory_space<vmem>>, vector<128x1xf32>
    %7 = vector.broadcast %6 : vector<128x1xf32> to vector<128x128xf32>
    %8 = arith.addf %5, %7 : vector<128x128xf32>
    %cst_8 = arith.constant 0.000000e+00 : f32
    %9 = vector.broadcast %cst_8 : f32 to vector<128x128xf32>
    %10 = arith.maximumf %8, %9 : vector<128x128xf32>
    %cst_9 = arith.constant dense<0.000000e+00> : vector<128xf32>
    %11 = vector.multi_reduction <add>, %10, %cst_9 [1] : vector<128x128xf32> to vector<128xf32>
    %12 = vector.shape_cast %11 : vector<128xf32> to vector<128x1xf32>
    %cst_10 = arith.constant 7.812500e-03 : f32
    %13 = vector.broadcast %cst_10 : f32 to vector<128x1xf32>
    %14 = arith.mulf %12, %13 : vector<128x1xf32>
    %15 = vector.broadcast %14 : vector<128x1xf32> to vector<128x128xf32>
    %16 = arith.subf %10, %15 : vector<128x128xf32>
    %17 = arith.mulf %16, %16 : vector<128x128xf32>
    %cst_11 = arith.constant dense<0.000000e+00> : vector<128xf32>
    %18 = vector.multi_reduction <add>, %17, %cst_11 [1] : vector<128x128xf32> to vector<128xf32>
    %19 = vector.shape_cast %18 : vector<128xf32> to vector<128x1xf32>
    %cst_12 = arith.constant 7.812500e-03 : f32
    %20 = vector.broadcast %cst_12 : f32 to vector<128x1xf32>
    %21 = arith.mulf %19, %20 : vector<128x1xf32>
    %cst_13 = arith.constant 9.99999974E-6 : f32
    %22 = vector.broadcast %cst_13 : f32 to vector<128x1xf32>
    %23 = arith.addf %21, %22 : vector<128x1xf32>
    %24 = math.rsqrt %23 : vector<128x1xf32>
    %25 = vector.broadcast %24 : vector<128x1xf32> to vector<128x128xf32>
    %26 = arith.mulf %16, %25 : vector<128x128xf32>
    %c0_14 = arith.constant 0 : index
    %c0_15 = arith.constant 0 : index
    %27 = vector.load %arg4[%c0_14, %c0_15] : memref<128x128xbf16, #tpu.memory_space<vmem>>, vector<128x128xbf16>
    %28 = arith.truncf %26 : vector<128x128xf32> to vector<128x128xbf16>
    %cst_16 = arith.constant dense<0.000000e+00> : vector<128x128xf32>
    %29 = tpu.matmul %27, %28, %cst_16 {dimension_numbers = #tpu.dot_dimension_numbers<[1], [0], [0], [1], [0, 0, 1, 1], [], []>} : vector<128x128xbf16>, vector<128x128xbf16>, vector<128x128xf32> -> vector<128x128xf32>
    %c0_17 = arith.constant 0 : index
    %c0_18 = arith.constant 0 : index
    %30 = vector.load %arg5[%c0_17, %c0_18] : memref<128x1xf32, #tpu.memory_space<vmem>>, vector<128x1xf32>
    %31 = vector.broadcast %30 : vector<128x1xf32> to vector<128x128xf32>
    %32 = arith.addf %29, %31 : vector<128x128xf32>
    %33 = arith.truncf %32 : vector<128x128xf32> to vector<128x128xbf16>
    %c0_19 = arith.constant 0 : index
    %c0_20 = arith.constant 0 : index
    %34 = vector.load %arg14[%c0_19, %c0_20] : memref<128x128xbf16, #tpu.memory_space<vmem>>, vector<128x128xbf16>
    %cst_21 = arith.constant dense<0.000000e+00> : vector<128x128xf32>
    %35 = tpu.matmul %33, %34, %cst_21 {dimension_numbers = #tpu.dot_dimension_numbers<[1], [0], [0], [1], [0, 0, 1, 1], [], []>} : vector<128x128xbf16>, vector<128x128xbf16>, vector<128x128xf32> -> vector<128x128xf32>
    %c0_22 = arith.constant 0 : index
    %c0_23 = arith.constant 0 : index
    %36 = vector.load %arg6[%c0_22, %c0_23] : memref<128x1xf32, #tpu.memory_space<vmem>>, vector<128x1xf32>
    %37 = vector.broadcast %36 : vector<128x1xf32> to vector<128x128xf32>
    %38 = arith.addf %35, %37 : vector<128x128xf32>
    %cst_24 = arith.constant 0.000000e+00 : f32
    %39 = vector.broadcast %cst_24 : f32 to vector<128x128xf32>
    %40 = arith.maximumf %38, %39 : vector<128x128xf32>
    %cst_25 = arith.constant dense<0.000000e+00> : vector<128xf32>
    %41 = vector.multi_reduction <add>, %40, %cst_25 [1] : vector<128x128xf32> to vector<128xf32>
    %42 = vector.shape_cast %41 : vector<128xf32> to vector<128x1xf32>
    %cst_26 = arith.constant 7.812500e-03 : f32
    %43 = vector.broadcast %cst_26 : f32 to vector<128x1xf32>
    %44 = arith.mulf %42, %43 : vector<128x1xf32>
    %45 = vector.broadcast %44 : vector<128x1xf32> to vector<128x128xf32>
    %46 = arith.subf %40, %45 : vector<128x128xf32>
    %47 = arith.mulf %46, %46 : vector<128x128xf32>
    %cst_27 = arith.constant dense<0.000000e+00> : vector<128xf32>
    %48 = vector.multi_reduction <add>, %47, %cst_27 [1] : vector<128x128xf32> to vector<128xf32>
    %49 = vector.shape_cast %48 : vector<128xf32> to vector<128x1xf32>
    %cst_28 = arith.constant 7.812500e-03 : f32
    %50 = vector.broadcast %cst_28 : f32 to vector<128x1xf32>
    %51 = arith.mulf %49, %50 : vector<128x1xf32>
    %cst_29 = arith.constant 9.99999974E-6 : f32
    %52 = vector.broadcast %cst_29 : f32 to vector<128x1xf32>
    %53 = arith.addf %51, %52 : vector<128x1xf32>
    %54 = math.rsqrt %53 : vector<128x1xf32>
    %55 = vector.broadcast %54 : vector<128x1xf32> to vector<128x128xf32>
    %56 = arith.mulf %46, %55 : vector<128x128xf32>
    %c0_30 = arith.constant 0 : index
    %c0_31 = arith.constant 0 : index
    %57 = vector.load %arg7[%c0_30, %c0_31] : memref<128x128xbf16, #tpu.memory_space<vmem>>, vector<128x128xbf16>
    %58 = arith.truncf %56 : vector<128x128xf32> to vector<128x128xbf16>
    %cst_32 = arith.constant dense<0.000000e+00> : vector<128x128xf32>
    %59 = tpu.matmul %57, %58, %cst_32 {dimension_numbers = #tpu.dot_dimension_numbers<[1], [0], [0], [1], [0, 0, 1, 1], [], []>} : vector<128x128xbf16>, vector<128x128xbf16>, vector<128x128xf32> -> vector<128x128xf32>
    %c0_33 = arith.constant 0 : index
    %c0_34 = arith.constant 0 : index
    %60 = vector.load %arg8[%c0_33, %c0_34] : memref<128x1xf32, #tpu.memory_space<vmem>>, vector<128x1xf32>
    %61 = vector.broadcast %60 : vector<128x1xf32> to vector<128x128xf32>
    %62 = arith.addf %59, %61 : vector<128x128xf32>
    %63 = arith.truncf %62 : vector<128x128xf32> to vector<128x128xbf16>
    %c0_35 = arith.constant 0 : index
    %c0_36 = arith.constant 0 : index
    %64 = vector.load %arg14[%c0_35, %c0_36] : memref<128x128xbf16, #tpu.memory_space<vmem>>, vector<128x128xbf16>
    %cst_37 = arith.constant dense<0.000000e+00> : vector<128x128xf32>
    %65 = tpu.matmul %63, %64, %cst_37 {dimension_numbers = #tpu.dot_dimension_numbers<[1], [0], [0], [1], [0, 0, 1, 1], [], []>} : vector<128x128xbf16>, vector<128x128xbf16>, vector<128x128xf32> -> vector<128x128xf32>
    %c0_38 = arith.constant 0 : index
    %c0_39 = arith.constant 0 : index
    %66 = vector.load %arg9[%c0_38, %c0_39] : memref<128x1xf32, #tpu.memory_space<vmem>>, vector<128x1xf32>
    %67 = vector.broadcast %66 : vector<128x1xf32> to vector<128x128xf32>
    %68 = arith.addf %65, %67 : vector<128x128xf32>
    %cst_40 = arith.constant 0.000000e+00 : f32
    %69 = vector.broadcast %cst_40 : f32 to vector<128x128xf32>
    %70 = arith.maximumf %68, %69 : vector<128x128xf32>
    %cst_41 = arith.constant dense<0.000000e+00> : vector<128xf32>
    %71 = vector.multi_reduction <add>, %70, %cst_41 [1] : vector<128x128xf32> to vector<128xf32>
    %72 = vector.shape_cast %71 : vector<128xf32> to vector<128x1xf32>
    %cst_42 = arith.constant 7.812500e-03 : f32
    %73 = vector.broadcast %cst_42 : f32 to vector<128x1xf32>
    %74 = arith.mulf %72, %73 : vector<128x1xf32>
    %75 = vector.broadcast %74 : vector<128x1xf32> to vector<128x128xf32>
    %76 = arith.subf %70, %75 : vector<128x128xf32>
    %77 = arith.mulf %76, %76 : vector<128x128xf32>
    %cst_43 = arith.constant dense<0.000000e+00> : vector<128xf32>
    %78 = vector.multi_reduction <add>, %77, %cst_43 [1] : vector<128x128xf32> to vector<128xf32>
    %79 = vector.shape_cast %78 : vector<128xf32> to vector<128x1xf32>
    %cst_44 = arith.constant 7.812500e-03 : f32
    %80 = vector.broadcast %cst_44 : f32 to vector<128x1xf32>
    %81 = arith.mulf %79, %80 : vector<128x1xf32>
    %cst_45 = arith.constant 9.99999974E-6 : f32
    %82 = vector.broadcast %cst_45 : f32 to vector<128x1xf32>
    %83 = arith.addf %81, %82 : vector<128x1xf32>
    %84 = math.rsqrt %83 : vector<128x1xf32>
    %85 = vector.broadcast %84 : vector<128x1xf32> to vector<128x128xf32>
    %86 = arith.mulf %76, %85 : vector<128x128xf32>
    %c0_46 = arith.constant 0 : index
    %c0_47 = arith.constant 0 : index
    %87 = vector.load %arg10[%c0_46, %c0_47] : memref<128x128xbf16, #tpu.memory_space<vmem>>, vector<128x128xbf16>
    %88 = arith.truncf %86 : vector<128x128xf32> to vector<128x128xbf16>
    %cst_48 = arith.constant dense<0.000000e+00> : vector<128x128xf32>
    %89 = tpu.matmul %87, %88, %cst_48 {dimension_numbers = #tpu.dot_dimension_numbers<[1], [0], [0], [1], [0, 0, 1, 1], [], []>} : vector<128x128xbf16>, vector<128x128xbf16>, vector<128x128xf32> -> vector<128x128xf32>
    %c0_49 = arith.constant 0 : index
    %c0_50 = arith.constant 0 : index
    %90 = vector.load %arg11[%c0_49, %c0_50] : memref<128x1xf32, #tpu.memory_space<vmem>>, vector<128x1xf32>
    %91 = vector.broadcast %90 : vector<128x1xf32> to vector<128x128xf32>
    %92 = arith.addf %89, %91 : vector<128x128xf32>
    %93 = arith.truncf %92 : vector<128x128xf32> to vector<128x128xbf16>
    %c0_51 = arith.constant 0 : index
    %c0_52 = arith.constant 0 : index
    %94 = vector.load %arg14[%c0_51, %c0_52] : memref<128x128xbf16, #tpu.memory_space<vmem>>, vector<128x128xbf16>
    %cst_53 = arith.constant dense<0.000000e+00> : vector<128x128xf32>
    %95 = tpu.matmul %93, %94, %cst_53 {dimension_numbers = #tpu.dot_dimension_numbers<[1], [0], [0], [1], [0, 0, 1, 1], [], []>} : vector<128x128xbf16>, vector<128x128xbf16>, vector<128x128xf32> -> vector<128x128xf32>
    %c0_54 = arith.constant 0 : index
    %c0_55 = arith.constant 0 : index
    %96 = vector.load %arg12[%c0_54, %c0_55] : memref<128x1xf32, #tpu.memory_space<vmem>>, vector<128x1xf32>
    %97 = vector.broadcast %96 : vector<128x1xf32> to vector<128x128xf32>
    %98 = arith.addf %95, %97 : vector<128x128xf32>
    %cst_56 = arith.constant 0.000000e+00 : f32
    %99 = vector.broadcast %cst_56 : f32 to vector<128x128xf32>
    %100 = arith.maximumf %98, %99 : vector<128x128xf32>
    %c0_57 = arith.constant 0 : index
    %c0_58 = arith.constant 0 : index
    %101 = vector.load %arg13[%c0_57, %c0_58] : memref<128x128xf32, #tpu.memory_space<vmem>>, vector<128x128xf32>
    tpu.vector_store %arg13[%c0_57, %c0_58], %100 {strides = array<i32>} : memref<128x128xf32, #tpu.memory_space<vmem>>, vector<128x128xf32>,
    return
  }
}

</mosaic_0001>

<llo_original>
// kernel: tpu_custom_call.1
$region0: #{tpu_custom_call.1}
  #allocation0 [shape = 'u32[]', space=smem, size = 0x4, offset = 0x4, fixed_abs, tag = 'smem constant byte address 0x4 - core index']
  #allocation1 [shape = 'u32[72,128]{1,0:T(1,128)}', space=vmem, size = 0x9000, scoped, tag = 'internal scratch']
  #allocation2 [shape = 'bf16[128,128]{1,0:T(8,128)(2,1)}', space=vmem, size = 0x8000, scoped, tag = 'scratch operand']
  #allocation3 [shape = 's32[1]{0}', space=sflag, size = 0x4, scoped, tag = 'scratch operand']
  #allocation6 [shape = 's32[]', space=sflag, size = 0x4, offset = 0, fixed_abs, tag = 'sflag constant byte address 0x0 - dummy sync flag']
  %s0 = inlined_call_operand.vmem [shape: bf16[128,128], index: 0, kind: input, shape index: {}]
  %s1 = inlined_call_operand.vmem [shape: bf16[128,128], index: 1, kind: input, shape index: {}]
  %s2 = inlined_call_operand.vmem [shape: bf16[128,128], index: 2, kind: input, shape index: {}]
  %s3 = inlined_call_operand.vmem [shape: f32[128,1], index: 3, kind: input, shape index: {}]
  %s4 = inlined_call_operand.vmem [shape: bf16[128,128], index: 4, kind: input, shape index: {}]
  %s5 = inlined_call_operand.vmem [shape: f32[128,1], index: 5, kind: input, shape index: {}]
  %s6 = inlined_call_operand.vmem [shape: f32[128,1], index: 6, kind: input, shape index: {}]
  %s7 = inlined_call_operand.vmem [shape: bf16[128,128], index: 7, kind: input, shape index: {}]
  %s8 = inlined_call_operand.vmem [shape: f32[128,1], index: 8, kind: input, shape index: {}]
  %s9 = inlined_call_operand.vmem [shape: f32[128,1], index: 9, kind: input, shape index: {}]
  %s10 = inlined_call_operand.vmem [shape: bf16[128,128], index: 10, kind: input, shape index: {}]
  %s11 = inlined_call_operand.vmem [shape: f32[128,1], index: 11, kind: input, shape index: {}]
  %s12 = inlined_call_operand.vmem [shape: f32[128,1], index: 12, kind: input, shape index: {}]
  %s13 = inlined_call_operand.hbm [shape: f32[128,128], index: 13, kind: output, shape index: {}]
  %s14 = sld [smem:[#allocation0]]
  $region77: #{tpu_custom_call.1} parent=0
    _
  %s16 = ssub.s32 1, %s14
  %s17 = scalar_select 0, %s16, %s14
  $region1: #{tpu_custom_call.1} parent=0
    #allocation4 [shape = 'u8[65536]{0}', space=vmem, size = 0x10000, scoped, tag = 'output window, operand 0, single buffered']
    #allocation5 [shape = 's32[1]{0}', space=sflag, size = 0x4, scoped, tag = 'scoped memory for tpu_custom_call.1']
    %18 = vsyncpa [#allocation5], 0
    // Predicated region
    $region2: #{tpu_custom_call.1} parent=1 // pred_check
      _
    $region3: #{tpu_custom_call.1} parent=1 // pred_check_branch
      %20 = sbr.rel (0) target = $region5
    $region4: #{tpu_custom_call.1} parent=1 // pred_region
      _
    $region5: #{tpu_custom_call.1} parent=1 // pred_fallthru
      _
    // Predicated region
    $region6: #{tpu_custom_call.1} parent=1 // pred_check
      _
    $region7: #{tpu_custom_call.1} parent=1 // pred_check_branch
      %22 = sbr.rel (0) target = $region9
    $region8: #{tpu_custom_call.1} parent=1 // pred_region
      _
    $region9: #{tpu_custom_call.1} parent=1 // pred_fallthru
      _
    // Predicated region
    $region10: #{tpu_custom_call.1} parent=1 // pred_check
      _
    $region11: #{tpu_custom_call.1} parent=1 // pred_check_branch
      %24 = sbr.rel (0) target = $region13
    $region12: #{tpu_custom_call.1} parent=1 // pred_region
      _
    $region13: #{tpu_custom_call.1} parent=1 // pred_fallthru
      _
    // Predicated region
    $region14: #{tpu_custom_call.1} parent=1 // pred_check
      _
    $region15: #{tpu_custom_call.1} parent=1 // pred_check_branch
      %26 = sbr.rel (0) target = $region17
    $region16: #{tpu_custom_call.1} parent=1 // pred_region
      _
    $region17: #{tpu_custom_call.1} parent=1 // pred_fallthru
      _
    // Predicated region
    $region18: #{tpu_custom_call.1} parent=1 // pred_check
      _
    $region19: #{tpu_custom_call.1} parent=1 // pred_check_branch
      %28 = sbr.rel (0) target = $region21
    $region20: #{tpu_custom_call.1} parent=1 // pred_region
      _
    $region21: #{tpu_custom_call.1} parent=1 // pred_fallthru
      _
    // Predicated region
    $region22: #{tpu_custom_call.1} parent=1 // pred_check
      _
    $region23: #{tpu_custom_call.1} parent=1 // pred_check_branch
      %30 = sbr.rel (0) target = $region25
    $region24: #{tpu_custom_call.1} parent=1 // pred_region
      _
    $region25: #{tpu_custom_call.1} parent=1 // pred_fallthru
      _
    // Predicated region
    $region26: #{tpu_custom_call.1} parent=1 // pred_check
      _
    $region27: #{tpu_custom_call.1} parent=1 // pred_check_branch
      %32 = sbr.rel (0) target = $region29
    $region28: #{tpu_custom_call.1} parent=1 // pred_region
      _
    $region29: #{tpu_custom_call.1} parent=1 // pred_fallthru
      _
    // Predicated region
    $region30: #{tpu_custom_call.1} parent=1 // pred_check
      _
    $region31: #{tpu_custom_call.1} parent=1 // pred_check_branch
      %34 = sbr.rel (0) target = $region33
    $region32: #{tpu_custom_call.1} parent=1 // pred_region
      _
    $region33: #{tpu_custom_call.1} parent=1 // pred_fallthru
      _
    // Predicated region
    $region34: #{tpu_custom_call.1} parent=1 // pred_check
      _
    $region35: #{tpu_custom_call.1} parent=1 // pred_check_branch
      %36 = sbr.rel (0) target = $region37
    $region36: #{tpu_custom_call.1} parent=1 // pred_region
      _
    $region37: #{tpu_custom_call.1} parent=1 // pred_fallthru
      _
    // Predicated region
    $region38: #{tpu_custom_call.1} parent=1 // pred_check
      _
    $region39: #{tpu_custom_call.1} parent=1 // pred_check_branch
      %38 = sbr.rel (0) target = $region41
    $region40: #{tpu_custom_call.1} parent=1 // pred_region
      _
    $region41: #{tpu_custom_call.1} parent=1 // pred_fallthru
      _
    // Predicated region
    $region42: #{tpu_custom_call.1} parent=1 // pred_check
      _
    $region43: #{tpu_custom_call.1} parent=1 // pred_check_branch
      %40 = sbr.rel (0) target = $region45
    $region44: #{tpu_custom_call.1} parent=1 // pred_region
      _
    $region45: #{tpu_custom_call.1} parent=1 // pred_fallthru
      _
    // Predicated region
    $region46: #{tpu_custom_call.1} parent=1 // pred_check
      _
    $region47: #{tpu_custom_call.1} parent=1 // pred_check_branch
      %42 = sbr.rel (0) target = $region49
    $region48: #{tpu_custom_call.1} parent=1 // pred_region
      _
    $region49: #{tpu_custom_call.1} parent=1 // pred_fallthru
      _
    // Predicated region
    $region50: #{tpu_custom_call.1} parent=1 // pred_check
      _
    $region51: #{tpu_custom_call.1} parent=1 // pred_check_branch
      %44 = sbr.rel (0) target = $region53
    $region52: #{tpu_custom_call.1} parent=1 // pred_region
      loop: start=0, step=1, limit=1
      $region54: #{tpu_custom_call.1} parent=52 // loop_pre_header
        _
      $region55: #{tpu_custom_call.1} parent=52 // loop_header
        %s46 = sphi 0, %s50
        %p47 = scmp.ge.s32.totalorder %s46, 1
        %s51 = sphi %s0, %s0
        %s52 = sphi [#allocation2], [#allocation2]
      $region56: #{tpu_custom_call.1} parent=52 // loop_header_branch
        %49 = sbr.rel (%p47) target = $region60
      $region57: #{tpu_custom_call.1} parent=52 // loop_body
        %v53 = vld [vmem:[%s51] sm:$0xff]
        %54 = vst [vmem:[%s52] sm:$0xff] %v53
        %v55 = vld [vmem:[%s51 + $0x8] sm:$0xff]
        %56 = vst [vmem:[%s52 + $0x8] sm:$0xff] %v55
        %v57 = vld [vmem:[%s51 + $0x10] sm:$0xff]
        %58 = vst [vmem:[%s52 + $0x10] sm:$0xff] %v57
        %v59 = vld [vmem:[%s51 + $0x18] sm:$0xff]
        %60 = vst [vmem:[%s52 + $0x18] sm:$0xff] %v59
        %v61 = vld [vmem:[%s51 + $0x20] sm:$0xff]
        %62 = vst [vmem:[%s52 + $0x20] sm:$0xff] %v61
        %v63 = vld [vmem:[%s51 + $0x28] sm:$0xff]
        %64 = vst [vmem:[%s52 + $0x28] sm:$0xff] %v63
        %v65 = vld [vmem:[%s51 + $0x30] sm:$0xff]
        %66 = vst [vmem:[%s52 + $0x30] sm:$0xff] %v65
        %v67 = vld [vmem:[%s51 + $0x38] sm:$0xff]
        %68 = vst [vmem:[%s52 + $0x38] sm:$0xff] %v67
      $region58: #{tpu_custom_call.1} parent=52 // loop_footer
        %s50 = sadd.s32 1, %s46
      $region59: #{tpu_custom_call.1} parent=52 // loop_footer_branch
        %45 = sbr.rel target = $region55
      $region60: #{tpu_custom_call.1} parent=52 // loop_exit
        _
    $region53: #{tpu_custom_call.1} parent=1 // pred_fallthru
      _
    // Predicated region
    $region61: #{tpu_custom_call.1} parent=1 // pred_check
      _
    $region62: #{tpu_custom_call.1} parent=1 // pred_check_branch
      %70 = sbr.rel target = $region64
    $region63: #{tpu_custom_call.1} parent=1 // pred_region
      _
    $region64: #{tpu_custom_call.1} parent=1 // pred_fallthru
      _
    // Predicated region
    $region65: #{tpu_custom_call.1} parent=1 // pred_check
      _
    $region66: #{tpu_custom_call.1} parent=1 // pred_check_branch
      %73 = sbr.rel (0) target = $region68
    $region67: #{tpu_custom_call.1} parent=1 // pred_region
      %74 = vsyncadd [#allocation3], 1024
    $region68: #{tpu_custom_call.1} parent=1 // pred_fallthru
      _
    %v75 = vld [vmem:[%s1] sm:$0xf]
    %v76 = vld [vmem:[%s1 + $0x4] sm:$0xf]
    %v77 = vld [vmem:[%s1 + $0x8] sm:$0xf]
    %v78 = vld [vmem:[%s1 + $0xc] sm:$0xf]
    %v79 = vld [vmem:[%s1 + $0x10] sm:$0xf]
    %v80 = vld [vmem:[%s1 + $0x14] sm:$0xf]
    %v81 = vld [vmem:[%s1 + $0x18] sm:$0xf]
    %v82 = vld [vmem:[%s1 + $0x1c] sm:$0xf]
    %v83 = vld [vmem:[%s1 + $0x20] sm:$0xf]
    %v84 = vld [vmem:[%s1 + $0x24] sm:$0xf]
    %v85 = vld [vmem:[%s1 + $0x28] sm:$0xf]
    %v86 = vld [vmem:[%s1 + $0x2c] sm:$0xf]
    %v87 = vld [vmem:[%s1 + $0x30] sm:$0xf]
    %v88 = vld [vmem:[%s1 + $0x34] sm:$0xf]
    %v89 = vld [vmem:[%s1 + $0x38] sm:$0xf]
    %v90 = vld [vmem:[%s1 + $0x3c] sm:$0xf]
    %v91 = vld [vmem:[%s2] sm:$0xf]
    %v92 = vld [vmem:[%s2 + $0x4] sm:$0xf]
    %v93 = vld [vmem:[%s2 + $0x8] sm:$0xf]
    %v94 = vld [vmem:[%s2 + $0xc] sm:$0xf]
    %v95 = vld [vmem:[%s2 + $0x10] sm:$0xf]
    %v96 = vld [vmem:[%s2 + $0x14] sm:$0xf]
    %v97 = vld [vmem:[%s2 + $0x18] sm:$0xf]
    %v98 = vld [vmem:[%s2 + $0x1c] sm:$0xf]
    %v99 = vld [vmem:[%s2 + $0x20] sm:$0xf]
    %v100 = vld [vmem:[%s2 + $0x24] sm:$0xf]
    %v101 = vld [vmem:[%s2 + $0x28] sm:$0xf]
    %v102 = vld [vmem:[%s2 + $0x2c] sm:$0xf]
    %v103 = vld [vmem:[%s2 + $0x30] sm:$0xf]
    %v104 = vld [vmem:[%s2 + $0x34] sm:$0xf]
    %v105 = vld [vmem:[%s2 + $0x38] sm:$0xf]
    %v106 = vld [vmem:[%s2 + $0x3c] sm:$0xf]
    %v123 = vunpack.c.l.b16 %v91
    %v124 = vunpack.c.l.b16 %v92
    %v125 = vunpack.c.l.b16 %v93
    %v126 = vunpack.c.l.b16 %v94
    %v127 = vunpack.c.l.b16 %v95
    %v128 = vunpack.c.l.b16 %v96
    %v129 = vunpack.c.l.b16 %v97
    %v130 = vunpack.c.l.b16 %v98
    %v131 = vunpack.c.l.b16 %v99
    %v132 = vunpack.c.l.b16 %v100
    %v133 = vunpack.c.l.b16 %v101
    %v134 = vunpack.c.l.b16 %v102
    %v135 = vunpack.c.l.b16 %v103
    %v136 = vunpack.c.l.b16 %v104
    %v137 = vunpack.c.l.b16 %v105
    %v138 = vunpack.c.l.b16 %v106
    %v139 = vpack.c.b16 %v124, %v123
    %v140 = vpack.c.b16 %v126, %v125
    %v141 = vpack.c.b16 %v128, %v127
    %v142 = vpack.c.b16 %v130, %v129
    %v143 = vpack.c.b16 %v132, %v131
    %v144 = vpack.c.b16 %v134, %v133
    %v145 = vpack.c.b16 %v136, %v135
    %v146 = vpack.c.b16 %v138, %v137
    %v171 = vunpack.c.l.b16 %v75
    %v172 = vunpack.c.l.b16 %v76
    %v173 = vunpack.c.l.b16 %v77
    %v174 = vunpack.c.l.b16 %v78
    %v175 = vunpack.c.l.b16 %v79
    %v176 = vunpack.c.l.b16 %v80
    %v177 = vunpack.c.l.b16 %v81
    %v178 = vunpack.c.l.b16 %v82
    %v179 = vunpack.c.l.b16 %v83
    %v180 = vunpack.c.l.b16 %v84
    %v181 = vunpack.c.l.b16 %v85
    %v182 = vunpack.c.l.b16 %v86
    %v183 = vunpack.c.l.b16 %v87
    %v184 = vunpack.c.l.b16 %v88
    %v185 = vunpack.c.l.b16 %v89
    %v186 = vunpack.c.l.b16 %v90
    %v187 = vpack.c.b16 %v172, %v171
    %v188 = vpack.c.b16 %v174, %v173
    %v189 = vpack.c.b16 %v176, %v175
    %v190 = vpack.c.b16 %v178, %v177
    %v191 = vpack.c.b16 %v180, %v179
    %v192 = vpack.c.b16 %v182, %v181
    %v193 = vpack.c.b16 %v184, %v183
    %v194 = vpack.c.b16 %v186, %v185
    %203 = vmatpush.bf16.msra.mxu0 %v194
    %204 = vmatpush.bf16.msra.mxu0 %v193
    %205 = vmatpush.bf16.msra.mxu0 %v192
    %206 = vmatpush.bf16.msra.mxu0 %v191
    %207 = vmatpush.bf16.msra.mxu0 %v190
    %208 = vmatpush.bf16.msra.mxu0 %v189
    %209 = vmatpush.bf16.msra.mxu0 %v188
    %210 = vmatpush.bf16.msra.mxu0 %v187
    %211 = vmatmul.bf16.gmra.mxu0 %v139
    %v212 = vpop.f32.mrf.mxu0
    %v213 = vadd.f32 0.0, %v212
    %v214 = vpop.f32.mrf.mxu0
    %v215 = vadd.f32 0.0, %v214
    %216 = vmatmul.bf16.gmra.mxu0 %v140
    %v217 = vpop.f32.mrf.mxu0
    %v218 = vadd.f32 0.0, %v217
    %v219 = vpop.f32.mrf.mxu0
    %v220 = vadd.f32 0.0, %v219
    %221 = vmatmul.bf16.gmra.mxu0 %v141
    %v222 = vpop.f32.mrf.mxu0
    %v223 = vadd.f32 0.0, %v222
    %v224 = vpop.f32.mrf.mxu0
    %v225 = vadd.f32 0.0, %v224
    %226 = vmatmul.bf16.gmra.mxu0 %v142
    %v227 = vpop.f32.mrf.mxu0
    %v228 = vadd.f32 0.0, %v227
    %v229 = vpop.f32.mrf.mxu0
    %v230 = vadd.f32 0.0, %v229
    %231 = vmatmul.bf16.gmra.mxu0 %v143
    %v232 = vpop.f32.mrf.mxu0
    %v233 = vadd.f32 0.0, %v232
    %v234 = vpop.f32.mrf.mxu0
    %v235 = vadd.f32 0.0, %v234
    %236 = vmatmul.bf16.gmra.mxu0 %v144
    %v237 = vpop.f32.mrf.mxu0
    %v238 = vadd.f32 0.0, %v237
    %v239 = vpop.f32.mrf.mxu0
    %v240 = vadd.f32 0.0, %v239
    %241 = vmatmul.bf16.gmra.mxu0 %v145
    %v242 = vpop.f32.mrf.mxu0
    %v243 = vadd.f32 0.0, %v242
    %v244 = vpop.f32.mrf.mxu0
    %v245 = vadd.f32 0.0, %v244
    %246 = vmatmul.bf16.gmra.mxu0 %v146
    %v247 = vpop.f32.mrf.mxu0
    %v248 = vadd.f32 0.0, %v247
    %v249 = vpop.f32.mrf.mxu0
    %v250 = vadd.f32 0.0, %v249
    %251 = vdwg.mxu0
    %v252 = vpack.c.bf16 %v215, %v213
    %v253 = vpack.c.bf16 %v220, %v218
    %v254 = vpack.c.bf16 %v225, %v223
    %v255 = vpack.c.bf16 %v230, %v228
    %v256 = vpack.c.bf16 %v235, %v233
    %v257 = vpack.c.bf16 %v240, %v238
    %v258 = vpack.c.bf16 %v245, %v243
    %v259 = vpack.c.bf16 %v250, %v248
    %s260 = smul.u32 4, 16
    %s261 = smul.u32 %s260, 1
    %s262 = sshll.u32 %s261, 4
    %263 = dma.done [#allocation3], %s262
    %v264 = vld [vmem:[#allocation2] sm:$0xf]
    %v265 = vld [vmem:[#allocation2 + $0x4] sm:$0xf]
    %v266 = vld [vmem:[#allocation2 + $0x8] sm:$0xf]
    %v267 = vld [vmem:[#allocation2 + $0xc] sm:$0xf]
    %v268 = vld [vmem:[#allocation2 + $0x10] sm:$0xf]
    %v269 = vld [vmem:[#allocation2 + $0x14] sm:$0xf]
    %v270 = vld [vmem:[#allocation2 + $0x18] sm:$0xf]
    %v271 = vld [vmem:[#allocation2 + $0x1c] sm:$0xf]
    %v272 = vld [vmem:[#allocation2 + $0x20] sm:$0xf]
    %v273 = vld [vmem:[#allocation2 + $0x24] sm:$0xf]
    %v274 = vld [vmem:[#allocation2 + $0x28] sm:$0xf]
    %v275 = vld [vmem:[#allocation2 + $0x2c] sm:$0xf]
    %v276 = vld [vmem:[#allocation2 + $0x30] sm:$0xf]
    %v277 = vld [vmem:[#allocation2 + $0x34] sm:$0xf]
    %v278 = vld [vmem:[#allocation2 + $0x38] sm:$0xf]
    %v279 = vld [vmem:[#allocation2 + $0x3c] sm:$0xf]
    %v280 = vld [vmem:[%s3] sm:$0xff]
    %v281 = vld [vmem:[%s3 + $0x8] sm:$0xff]
    %v282 = vld [vmem:[%s3 + $0x10] sm:$0xff]
    %v283 = vld [vmem:[%s3 + $0x18] sm:$0xff]
    %v284 = vld [vmem:[%s3 + $0x20] sm:$0xff]
    %v285 = vld [vmem:[%s3 + $0x28] sm:$0xff]
    %v286 = vld [vmem:[%s3 + $0x30] sm:$0xff]
    %v287 = vld [vmem:[%s3 + $0x38] sm:$0xff]
    %v288 = vld [vmem:[%s3 + $0x40] sm:$0xff]
    %v289 = vld [vmem:[%s3 + $0x48] sm:$0xff]
    %v290 = vld [vmem:[%s3 + $0x50] sm:$0xff]
    %v291 = vld [vmem:[%s3 + $0x58] sm:$0xff]
    %v292 = vld [vmem:[%s3 + $0x60] sm:$0xff]
    %v293 = vld [vmem:[%s3 + $0x68] sm:$0xff]
    %v294 = vld [vmem:[%s3 + $0x70] sm:$0xff]
    %v295 = vld [vmem:[%s3 + $0x78] sm:$0xff]
    %297 = vset.pattern.permute.xlu0 0
    %298 = vperm.xlu0 %297, %v280
    %v299 = vpop.permute.xlu0 %298
    %302 = vset.pattern.permute.xlu0 0
    %303 = vperm.xlu0 %302, %v281
    %v304 = vpop.permute.xlu0 %303
    %307 = vset.pattern.permute.xlu0 0
    %308 = vperm.xlu0 %307, %v282
    %v309 = vpop.permute.xlu0 %308
    %312 = vset.pattern.permute.xlu0 0
    %313 = vperm.xlu0 %312, %v283
    %v314 = vpop.permute.xlu0 %313
    %317 = vset.pattern.permute.xlu0 0
    %318 = vperm.xlu0 %317, %v284
    %v319 = vpop.permute.xlu0 %318
    %322 = vset.pattern.permute.xlu0 0
    %323 = vperm.xlu0 %322, %v285
    %v324 = vpop.permute.xlu0 %323
    %327 = vset.pattern.permute.xlu0 0
    %328 = vperm.xlu0 %327, %v286
    %v329 = vpop.permute.xlu0 %328
    %332 = vset.pattern.permute.xlu0 0
    %333 = vperm.xlu0 %332, %v287
    %v334 = vpop.permute.xlu0 %333
    %337 = vset.pattern.permute.xlu0 0
    %338 = vperm.xlu0 %337, %v288
    %v339 = vpop.permute.xlu0 %338
    %342 = vset.pattern.permute.xlu0 0
    %343 = vperm.xlu0 %342, %v289
    %v344 = vpop.permute.xlu0 %343
    %347 = vset.pattern.permute.xlu0 0
    %348 = vperm.xlu0 %347, %v290
    %v349 = vpop.permute.xlu0 %348
    %352 = vset.pattern.permute.xlu0 0
    %353 = vperm.xlu0 %352, %v291
    %v354 = vpop.permute.xlu0 %353
    %357 = vset.pattern.permute.xlu0 0
    %358 = vperm.xlu0 %357, %v292
    %v359 = vpop.permute.xlu0 %358
    %362 = vset.pattern.permute.xlu0 0
    %363 = vperm.xlu0 %362, %v293
    %v364 = vpop.permute.xlu0 %363
    %367 = vset.pattern.permute.xlu0 0
    %368 = vperm.xlu0 %367, %v294
    %v369 = vpop.permute.xlu0 %368
    %372 = vset.pattern.permute.xlu0 0
    %373 = vperm.xlu0 %372, %v295
    %v374 = vpop.permute.xlu0 %373
    %v392 = vunpack.c.l.b16 %v264
    %v393 = vunpack.c.l.b16 %v265
    %v394 = vunpack.c.l.b16 %v266
    %v395 = vunpack.c.l.b16 %v267
    %v396 = vunpack.c.l.b16 %v268
    %v397 = vunpack.c.l.b16 %v269
    %v398 = vunpack.c.l.b16 %v270
    %v399 = vunpack.c.l.b16 %v271
    %v400 = vunpack.c.l.b16 %v272
    %v401 = vunpack.c.l.b16 %v273
    %v402 = vunpack.c.l.b16 %v274
    %v403 = vunpack.c.l.b16 %v275
    %v404 = vunpack.c.l.b16 %v276
    %v405 = vunpack.c.l.b16 %v277
    %v406 = vunpack.c.l.b16 %v278
    %v407 = vunpack.c.l.b16 %v279
    %v408 = vpack.c.b16 %v393, %v392
    %v409 = vpack.c.b16 %v395, %v394
    %v410 = vpack.c.b16 %v397, %v396
    %v411 = vpack.c.b16 %v399, %v398
    %v412 = vpack.c.b16 %v401, %v400
    %v413 = vpack.c.b16 %v403, %v402
    %v414 = vpack.c.b16 %v405, %v404
    %v415 = vpack.c.b16 %v407, %v406
    %424 = vmatpush.bf16.msra.mxu0 %v415
    %425 = vmatpush.bf16.msra.mxu0 %v414
    %426 = vmatpush.bf16.msra.mxu0 %v413
    %427 = vmatpush.bf16.msra.mxu0 %v412
    %428 = vmatpush.bf16.msra.mxu0 %v411
    %429 = vmatpush.bf16.msra.mxu0 %v410
    %430 = vmatpush.bf16.msra.mxu0 %v409
    %431 = vmatpush.bf16.msra.mxu0 %v408
    %432 = vmatmul.bf16.gmra.mxu0 %v252
    %v433 = vpop.f32.mrf.mxu0
    %v434 = vadd.f32 %v299, %v433
    %v435 = vpop.f32.mrf.mxu0
    %v436 = vadd.f32 %v304, %v435
    %437 = vmatmul.bf16.gmra.mxu0 %v253
    %v438 = vpop.f32.mrf.mxu0
    %v439 = vadd.f32 %v309, %v438
    %v440 = vpop.f32.mrf.mxu0
    %v441 = vadd.f32 %v314, %v440
    %442 = vmatmul.bf16.gmra.mxu0 %v254
    %v443 = vpop.f32.mrf.mxu0
    %v444 = vadd.f32 %v319, %v443
    %v445 = vpop.f32.mrf.mxu0
    %v446 = vadd.f32 %v324, %v445
    %447 = vmatmul.bf16.gmra.mxu0 %v255
    %v448 = vpop.f32.mrf.mxu0
    %v449 = vadd.f32 %v329, %v448
    %v450 = vpop.f32.mrf.mxu0
    %v451 = vadd.f32 %v334, %v450
    %452 = vmatmul.bf16.gmra.mxu0 %v256
    %v453 = vpop.f32.mrf.mxu0
    %v454 = vadd.f32 %v339, %v453
    %v455 = vpop.f32.mrf.mxu0
    %v456 = vadd.f32 %v344, %v455
    %457 = vmatmul.bf16.gmra.mxu0 %v257
    %v458 = vpop.f32.mrf.mxu0
    %v459 = vadd.f32 %v349, %v458
    %v460 = vpop.f32.mrf.mxu0
    %v461 = vadd.f32 %v354, %v460
    %462 = vmatmul.bf16.gmra.mxu0 %v258
    %v463 = vpop.f32.mrf.mxu0
    %v464 = vadd.f32 %v359, %v463
    %v465 = vpop.f32.mrf.mxu0
    %v466 = vadd.f32 %v364, %v465
    %467 = vmatmul.bf16.gmra.mxu0 %v259
    %v468 = vpop.f32.mrf.mxu0
    %v469 = vadd.f32 %v369, %v468
    %v470 = vpop.f32.mrf.mxu0
    %v471 = vadd.f32 %v374, %v470
    %472 = vdwg.mxu0
    %v473 = vmax.f32 %v434, 0.0
    %v474 = vmax.f32 %v436, 0.0
    %v475 = vmax.f32 %v439, 0.0
    %v476 = vmax.f32 %v441, 0.0
    %v477 = vmax.f32 %v444, 0.0
    %v478 = vmax.f32 %v446, 0.0
    %v479 = vmax.f32 %v449, 0.0
    %v480 = vmax.f32 %v451, 0.0
    %v481 = vmax.f32 %v454, 0.0
    %v482 = vmax.f32 %v456, 0.0
    %v483 = vmax.f32 %v459, 0.0
    %v484 = vmax.f32 %v461, 0.0
    %v485 = vmax.f32 %v464, 0.0
    %v486 = vmax.f32 %v466, 0.0
    %v487 = vmax.f32 %v469, 0.0
    %v488 = vmax.f32 %v471, 0.0
    %489 = vadd.xlane.f32.xlu0 %v473
    %v490 = vpop.xlane.xlu0 %489
    %491 = vadd.xlane.f32.xlu0 %v474
    %v492 = vpop.xlane.xlu0 %491
    %493 = vadd.xlane.f32.xlu0 %v475
    %v494 = vpop.xlane.xlu0 %493
    %495 = vadd.xlane.f32.xlu0 %v476
    %v496 = vpop.xlane.xlu0 %495
    %497 = vadd.xlane.f32.xlu0 %v477
    %v498 = vpop.xlane.xlu0 %497
    %499 = vadd.xlane.f32.xlu0 %v478
    %v500 = vpop.xlane.xlu0 %499
    %501 = vadd.xlane.f32.xlu0 %v479
    %v502 = vpop.xlane.xlu0 %501
    %503 = vadd.xlane.f32.xlu0 %v480
    %v504 = vpop.xlane.xlu0 %503
    %505 = vadd.xlane.f32.xlu0 %v481
    %v506 = vpop.xlane.xlu0 %505
    %507 = vadd.xlane.f32.xlu0 %v482
    %v508 = vpop.xlane.xlu0 %507
    %509 = vadd.xlane.f32.xlu0 %v483
    %v510 = vpop.xlane.xlu0 %509
    %511 = vadd.xlane.f32.xlu0 %v484
    %v512 = vpop.xlane.xlu0 %511
    %513 = vadd.xlane.f32.xlu0 %v485
    %v514 = vpop.xlane.xlu0 %513
    %515 = vadd.xlane.f32.xlu0 %v486
    %v516 = vpop.xlane.xlu0 %515
    %517 = vadd.xlane.f32.xlu0 %v487
    %v518 = vpop.xlane.xlu0 %517
    %519 = vadd.xlane.f32.xlu0 %v488
    %v520 = vpop.xlane.xlu0 %519
    %v521 = vmul.f32 %v490, 0.0078125
    %v522 = vmul.f32 %v492, 0.0078125
    %v523 = vmul.f32 %v494, 0.0078125
    %v524 = vmul.f32 %v496, 0.0078125
    %v525 = vmul.f32 %v498, 0.0078125
    %v526 = vmul.f32 %v500, 0.0078125
    %v527 = vmul.f32 %v502, 0.0078125
    %v528 = vmul.f32 %v504, 0.0078125
    %v529 = vmul.f32 %v506, 0.0078125
    %v530 = vmul.f32 %v508, 0.0078125
    %v531 = vmul.f32 %v510, 0.0078125
    %v532 = vmul.f32 %v512, 0.0078125
    %v533 = vmul.f32 %v514, 0.0078125
    %v534 = vmul.f32 %v516, 0.0078125
    %v535 = vmul.f32 %v518, 0.0078125
    %v536 = vmul.f32 %v520, 0.0078125
    %v537 = vsub.f32 %v473, %v521
    %v538 = vsub.f32 %v474, %v522
    %v539 = vsub.f32 %v475, %v523
    %v540 = vsub.f32 %v476, %v524
    %v541 = vsub.f32 %v477, %v525
    %v542 = vsub.f32 %v478, %v526
    %v543 = vsub.f32 %v479, %v527
    %v544 = vsub.f32 %v480, %v528
    %v545 = vsub.f32 %v481, %v529
    %v546 = vsub.f32 %v482, %v530
    %v547 = vsub.f32 %v483, %v531
    %v548 = vsub.f32 %v484, %v532
    %v549 = vsub.f32 %v485, %v533
    %v550 = vsub.f32 %v486, %v534
    %v551 = vsub.f32 %v487, %v535
    %v552 = vsub.f32 %v488, %v536
    %v553 = vmul.f32 %v537, %v537
    %v554 = vmul.f32 %v538, %v538
    %v555 = vmul.f32 %v539, %v539
    %v556 = vmul.f32 %v540, %v540
    %v557 = vmul.f32 %v541, %v541
    %v558 = vmul.f32 %v542, %v542
    %v559 = vmul.f32 %v543, %v543
    %v560 = vmul.f32 %v544, %v544
    %v561 = vmul.f32 %v545, %v545
    %v562 = vmul.f32 %v546, %v546
    %v563 = vmul.f32 %v547, %v547
    %v564 = vmul.f32 %v548, %v548
    %v565 = vmul.f32 %v549, %v549
    %v566 = vmul.f32 %v550, %v550
    %v567 = vmul.f32 %v551, %v551
    %v568 = vmul.f32 %v552, %v552
    %569 = vadd.xlane.f32.xlu0 %v553
    %v570 = vpop.xlane.xlu0 %569
    %571 = vadd.xlane.f32.xlu0 %v554
    %v572 = vpop.xlane.xlu0 %571
    %573 = vadd.xlane.f32.xlu0 %v555
    %v574 = vpop.xlane.xlu0 %573
    %575 = vadd.xlane.f32.xlu0 %v556
    %v576 = vpop.xlane.xlu0 %575
    %577 = vadd.xlane.f32.xlu0 %v557
    %v578 = vpop.xlane.xlu0 %577
    %579 = vadd.xlane.f32.xlu0 %v558
    %v580 = vpop.xlane.xlu0 %579
    %581 = vadd.xlane.f32.xlu0 %v559
    %v582 = vpop.xlane.xlu0 %581
    %583 = vadd.xlane.f32.xlu0 %v560
    %v584 = vpop.xlane.xlu0 %583
    %585 = vadd.xlane.f32.xlu0 %v561
    %v586 = vpop.xlane.xlu0 %585
    %587 = vadd.xlane.f32.xlu0 %v562
    %v588 = vpop.xlane.xlu0 %587
    %589 = vadd.xlane.f32.xlu0 %v563
    %v590 = vpop.xlane.xlu0 %589
    %591 = vadd.xlane.f32.xlu0 %v564
    %v592 = vpop.xlane.xlu0 %591
    %593 = vadd.xlane.f32.xlu0 %v565
    %v594 = vpop.xlane.xlu0 %593
    %595 = vadd.xlane.f32.xlu0 %v566
    %v596 = vpop.xlane.xlu0 %595
    %597 = vadd.xlane.f32.xlu0 %v567
    %v598 = vpop.xlane.xlu0 %597
    %599 = vadd.xlane.f32.xlu0 %v568
    %v600 = vpop.xlane.xlu0 %599
    %v601 = vmul.f32 %v570, 0.0078125
    %v602 = vmul.f32 %v572, 0.0078125
    %v603 = vmul.f32 %v574, 0.0078125
    %v604 = vmul.f32 %v576, 0.0078125
    %v605 = vmul.f32 %v578, 0.0078125
    %v606 = vmul.f32 %v580, 0.0078125
    %v607 = vmul.f32 %v582, 0.0078125
    %v608 = vmul.f32 %v584, 0.0078125
    %v609 = vmul.f32 %v586, 0.0078125
    %v610 = vmul.f32 %v588, 0.0078125
    %v611 = vmul.f32 %v590, 0.0078125
    %v612 = vmul.f32 %v592, 0.0078125
    %v613 = vmul.f32 %v594, 0.0078125
    %v614 = vmul.f32 %v596, 0.0078125
    %v615 = vmul.f32 %v598, 0.0078125
    %v616 = vmul.f32 %v600, 0.0078125
    %v617 = vadd.f32 %v601, 1e-05
    %v618 = vadd.f32 %v602, 1e-05
    %v619 = vadd.f32 %v603, 1e-05
    %v620 = vadd.f32 %v604, 1e-05
    %v621 = vadd.f32 %v605, 1e-05
    %v622 = vadd.f32 %v606, 1e-05
    %v623 = vadd.f32 %v607, 1e-05
    %v624 = vadd.f32 %v608, 1e-05
    %v625 = vadd.f32 %v609, 1e-05
    %v626 = vadd.f32 %v610, 1e-05
    %v627 = vadd.f32 %v611, 1e-05
    %v628 = vadd.f32 %v612, 1e-05
    %v629 = vadd.f32 %v613, 1e-05
    %v630 = vadd.f32 %v614, 1e-05
    %v631 = vadd.f32 %v615, 1e-05
    %v632 = vadd.f32 %v616, 1e-05
    %v633 = vrsqrt.pop %v617
    %v634 = vmul.f32 %v633, %v617
    %v635 = vmul.f32 %v634, %v633
    %v636 = vmul.f32 0.5, %v635
    %v637 = vsub.f32 1.5, %v636
    %v638 = vmul.f32 %v633, %v637
    %vm639 = vweird.f32 %v617
    %vm640 = vweird.f32 %v633
    %vm641 = vmor %vm639, %vm640
    %v642 = vsel %vm641, %v633, %v638
    %v643 = vrsqrt.pop %v618
    %v644 = vmul.f32 %v643, %v618
    %v645 = vmul.f32 %v644, %v643
    %v646 = vmul.f32 0.5, %v645
    %v647 = vsub.f32 1.5, %v646
    %v648 = vmul.f32 %v643, %v647
    %vm649 = vweird.f32 %v618
    %vm650 = vweird.f32 %v643
    %vm651 = vmor %vm649, %vm650
    %v652 = vsel %vm651, %v643, %v648
    %v653 = vrsqrt.pop %v619
    %v654 = vmul.f32 %v653, %v619
    %v655 = vmul.f32 %v654, %v653
    %v656 = vmul.f32 0.5, %v655
    %v657 = vsub.f32 1.5, %v656
    %v658 = vmul.f32 %v653, %v657
    %vm659 = vweird.f32 %v619
    %vm660 = vweird.f32 %v653
    %vm661 = vmor %vm659, %vm660
    %v662 = vsel %vm661, %v653, %v658
    %v663 = vrsqrt.pop %v620
    %v664 = vmul.f32 %v663, %v620
    %v665 = vmul.f32 %v664, %v663
    %v666 = vmul.f32 0.5, %v665
    %v667 = vsub.f32 1.5, %v666
    %v668 = vmul.f32 %v663, %v667
    %vm669 = vweird.f32 %v620
    %vm670 = vweird.f32 %v663
    %vm671 = vmor %vm669, %vm670
    %v672 = vsel %vm671, %v663, %v668
    %v673 = vrsqrt.pop %v621
    %v674 = vmul.f32 %v673, %v621
    %v675 = vmul.f32 %v674, %v673
    %v676 = vmul.f32 0.5, %v675
    %v677 = vsub.f32 1.5, %v676
    %v678 = vmul.f32 %v673, %v677
    %vm679 = vweird.f32 %v621
    %vm680 = vweird.f32 %v673
    %vm681 = vmor %vm679, %vm680
    %v682 = vsel %vm681, %v673, %v678
    %v683 = vrsqrt.pop %v622
    %v684 = vmul.f32 %v683, %v622
    %v685 = vmul.f32 %v684, %v683
    %v686 = vmul.f32 0.5, %v685
    %v687 = vsub.f32 1.5, %v686
    %v688 = vmul.f32 %v683, %v687
    %vm689 = vweird.f32 %v622
    %vm690 = vweird.f32 %v683
    %vm691 = vmor %vm689, %vm690
    %v692 = vsel %vm691, %v683, %v688
    %v693 = vrsqrt.pop %v623
    %v694 = vmul.f32 %v693, %v623
    %v695 = vmul.f32 %v694, %v693
    %v696 = vmul.f32 0.5, %v695
    %v697 = vsub.f32 1.5, %v696
    %v698 = vmul.f32 %v693, %v697
    %vm699 = vweird.f32 %v623
    %vm700 = vweird.f32 %v693
    %vm701 = vmor %vm699, %vm700
    %v702 = vsel %vm701, %v693, %v698
    %v703 = vrsqrt.pop %v624
    %v704 = vmul.f32 %v703, %v624
    %v705 = vmul.f32 %v704, %v703
    %v706 = vmul.f32 0.5, %v705
    %v707 = vsub.f32 1.5, %v706
    %v708 = vmul.f32 %v703, %v707
    %vm709 = vweird.f32 %v624
    %vm710 = vweird.f32 %v703
    %vm711 = vmor %vm709, %vm710
    %v712 = vsel %vm711, %v703, %v708
    %v713 = vrsqrt.pop %v625
    %v714 = vmul.f32 %v713, %v625
    %v715 = vmul.f32 %v714, %v713
    %v716 = vmul.f32 0.5, %v715
    %v717 = vsub.f32 1.5, %v716
    %v718 = vmul.f32 %v713, %v717
    %vm719 = vweird.f32 %v625
    %vm720 = vweird.f32 %v713
    %vm721 = vmor %vm719, %vm720
    %v722 = vsel %vm721, %v713, %v718
    %v723 = vrsqrt.pop %v626
    %v724 = vmul.f32 %v723, %v626
    %v725 = vmul.f32 %v724, %v723
    %v726 = vmul.f32 0.5, %v725
    %v727 = vsub.f32 1.5, %v726
    %v728 = vmul.f32 %v723, %v727
    %vm729 = vweird.f32 %v626
    %vm730 = vweird.f32 %v723
    %vm731 = vmor %vm729, %vm730
    %v732 = vsel %vm731, %v723, %v728
    %v733 = vrsqrt.pop %v627
    %v734 = vmul.f32 %v733, %v627
    %v735 = vmul.f32 %v734, %v733
    %v736 = vmul.f32 0.5, %v735
    %v737 = vsub.f32 1.5, %v736
    %v738 = vmul.f32 %v733, %v737
    %vm739 = vweird.f32 %v627
    %vm740 = vweird.f32 %v733
    %vm741 = vmor %vm739, %vm740
    %v742 = vsel %vm741, %v733, %v738
    %v743 = vrsqrt.pop %v628
    %v744 = vmul.f32 %v743, %v628
    %v745 = vmul.f32 %v744, %v743
    %v746 = vmul.f32 0.5, %v745
    %v747 = vsub.f32 1.5, %v746
    %v748 = vmul.f32 %v743, %v747
    %vm749 = vweird.f32 %v628
    %vm750 = vweird.f32 %v743
    %vm751 = vmor %vm749, %vm750
    %v752 = vsel %vm751, %v743, %v748
    %v753 = vrsqrt.pop %v629
    %v754 = vmul.f32 %v753, %v629
    %v755 = vmul.f32 %v754, %v753
    %v756 = vmul.f32 0.5, %v755
    %v757 = vsub.f32 1.5, %v756
    %v758 = vmul.f32 %v753, %v757
    %vm759 = vweird.f32 %v629
    %vm760 = vweird.f32 %v753
    %vm761 = vmor %vm759, %vm760
    %v762 = vsel %vm761, %v753, %v758
    %v763 = vrsqrt.pop %v630
    %v764 = vmul.f32 %v763, %v630
    %v765 = vmul.f32 %v764, %v763
    %v766 = vmul.f32 0.5, %v765
    %v767 = vsub.f32 1.5, %v766
    %v768 = vmul.f32 %v763, %v767
    %vm769 = vweird.f32 %v630
    %vm770 = vweird.f32 %v763
    %vm771 = vmor %vm769, %vm770
    %v772 = vsel %vm771, %v763, %v768
    %v773 = vrsqrt.pop %v631
    %v774 = vmul.f32 %v773, %v631
    %v775 = vmul.f32 %v774, %v773
    %v776 = vmul.f32 0.5, %v775
    %v777 = vsub.f32 1.5, %v776
    %v778 = vmul.f32 %v773, %v777
    %vm779 = vweird.f32 %v631
    %vm780 = vweird.f32 %v773
    %vm781 = vmor %vm779, %vm780
    %v782 = vsel %vm781, %v773, %v778
    %v783 = vrsqrt.pop %v632
    %v784 = vmul.f32 %v783, %v632
    %v785 = vmul.f32 %v784, %v783
    %v786 = vmul.f32 0.5, %v785
    %v787 = vsub.f32 1.5, %v786
    %v788 = vmul.f32 %v783, %v787
    %vm789 = vweird.f32 %v632
    %vm790 = vweird.f32 %v783
    %vm791 = vmor %vm789, %vm790
    %v792 = vsel %vm791, %v783, %v788
    %v793 = vmul.f32 %v537, %v642
    %v794 = vmul.f32 %v538, %v652
    %v795 = vmul.f32 %v539, %v662
    %v796 = vmul.f32 %v540, %v672
    %v797 = vmul.f32 %v541, %v682
    %v798 = vmul.f32 %v542, %v692
    %v799 = vmul.f32 %v543, %v702
    %v800 = vmul.f32 %v544, %v712
    %v801 = vmul.f32 %v545, %v722
    %v802 = vmul.f32 %v546, %v732
    %v803 = vmul.f32 %v547, %v742
    %v804 = vmul.f32 %v548, %v752
    %v805 = vmul.f32 %v549, %v762
    %v806 = vmul.f32 %v550, %v772
    %v807 = vmul.f32 %v551, %v782
    %v808 = vmul.f32 %v552, %v792
    %v809 = vld [vmem:[%s4] sm:$0xf]
    %v810 = vld [vmem:[%s4 + $0x4] sm:$0xf]
    %v811 = vld [vmem:[%s4 + $0x8] sm:$0xf]
    %v812 = vld [vmem:[%s4 + $0xc] sm:$0xf]
    %v813 = vld [vmem:[%s4 + $0x10] sm:$0xf]
    %v814 = vld [vmem:[%s4 + $0x14] sm:$0xf]
    %v815 = vld [vmem:[%s4 + $0x18] sm:$0xf]
    %v816 = vld [vmem:[%s4 + $0x1c] sm:$0xf]
    %v817 = vld [vmem:[%s4 + $0x20] sm:$0xf]
    %v818 = vld [vmem:[%s4 + $0x24] sm:$0xf]
    %v819 = vld [vmem:[%s4 + $0x28] sm:$0xf]
    %v820 = vld [vmem:[%s4 + $0x2c] sm:$0xf]
    %v821 = vld [vmem:[%s4 + $0x30] sm:$0xf]
    %v822 = vld [vmem:[%s4 + $0x34] sm:$0xf]
    %v823 = vld [vmem:[%s4 + $0x38] sm:$0xf]
    %v824 = vld [vmem:[%s4 + $0x3c] sm:$0xf]
    %v825 = vpack.c.bf16 %v794, %v793
    %v826 = vpack.c.bf16 %v796, %v795
    %v827 = vpack.c.bf16 %v798, %v797
    %v828 = vpack.c.bf16 %v800, %v799
    %v829 = vpack.c.bf16 %v802, %v801
    %v830 = vpack.c.bf16 %v804, %v803
    %v831 = vpack.c.bf16 %v806, %v805
    %v832 = vpack.c.bf16 %v808, %v807
    %v833 = vld [vmem:[%s5] sm:$0xff]
    %v834 = vld [vmem:[%s5 + $0x8] sm:$0xff]
    %v835 = vld [vmem:[%s5 + $0x10] sm:$0xff]
    %v836 = vld [vmem:[%s5 + $0x18] sm:$0xff]
    %v837 = vld [vmem:[%s5 + $0x20] sm:$0xff]
    %v838 = vld [vmem:[%s5 + $0x28] sm:$0xff]
    %v839 = vld [vmem:[%s5 + $0x30] sm:$0xff]
    %v840 = vld [vmem:[%s5 + $0x38] sm:$0xff]
    %v841 = vld [vmem:[%s5 + $0x40] sm:$0xff]
    %v842 = vld [vmem:[%s5 + $0x48] sm:$0xff]
    %v843 = vld [vmem:[%s5 + $0x50] sm:$0xff]
    %v844 = vld [vmem:[%s5 + $0x58] sm:$0xff]
    %v845 = vld [vmem:[%s5 + $0x60] sm:$0xff]
    %v846 = vld [vmem:[%s5 + $0x68] sm:$0xff]
    %v847 = vld [vmem:[%s5 + $0x70] sm:$0xff]
    %v848 = vld [vmem:[%s5 + $0x78] sm:$0xff]
    %850 = vset.pattern.permute.xlu0 0
    %851 = vperm.xlu0 %850, %v833
    %v852 = vpop.permute.xlu0 %851
    %855 = vset.pattern.permute.xlu0 0
    %856 = vperm.xlu0 %855, %v834
    %v857 = vpop.permute.xlu0 %856
    %860 = vset.pattern.permute.xlu0 0
    %861 = vperm.xlu0 %860, %v835
    %v862 = vpop.permute.xlu0 %861
    %865 = vset.pattern.permute.xlu0 0
    %866 = vperm.xlu0 %865, %v836
    %v867 = vpop.permute.xlu0 %866
    %870 = vset.pattern.permute.xlu0 0
    %871 = vperm.xlu0 %870, %v837
    %v872 = vpop.permute.xlu0 %871
    %875 = vset.pattern.permute.xlu0 0
    %876 = vperm.xlu0 %875, %v838
    %v877 = vpop.permute.xlu0 %876
    %880 = vset.pattern.permute.xlu0 0
    %881 = vperm.xlu0 %880, %v839
    %v882 = vpop.permute.xlu0 %881
    %885 = vset.pattern.permute.xlu0 0
    %886 = vperm.xlu0 %885, %v840
    %v887 = vpop.permute.xlu0 %886
    %890 = vset.pattern.permute.xlu0 0
    %891 = vperm.xlu0 %890, %v841
    %v892 = vpop.permute.xlu0 %891
    %895 = vset.pattern.permute.xlu0 0
    %896 = vperm.xlu0 %895, %v842
    %v897 = vpop.permute.xlu0 %896
    %900 = vset.pattern.permute.xlu0 0
    %901 = vperm.xlu0 %900, %v843
    %v902 = vpop.permute.xlu0 %901
    %905 = vset.pattern.permute.xlu0 0
    %906 = vperm.xlu0 %905, %v844
    %v907 = vpop.permute.xlu0 %906
    %910 = vset.pattern.permute.xlu0 0
    %911 = vperm.xlu0 %910, %v845
    %v912 = vpop.permute.xlu0 %911
    %915 = vset.pattern.permute.xlu0 0
    %916 = vperm.xlu0 %915, %v846
    %v917 = vpop.permute.xlu0 %916
    %920 = vset.pattern.permute.xlu0 0
    %921 = vperm.xlu0 %920, %v847
    %v922 = vpop.permute.xlu0 %921
    %925 = vset.pattern.permute.xlu0 0
    %926 = vperm.xlu0 %925, %v848
    %v927 = vpop.permute.xlu0 %926
    %v945 = vunpack.c.l.b16 %v809
    %v946 = vunpack.c.l.b16 %v810
    %v947 = vunpack.c.l.b16 %v811
    %v948 = vunpack.c.l.b16 %v812
    %v949 = vunpack.c.l.b16 %v813
    %v950 = vunpack.c.l.b16 %v814
    %v951 = vunpack.c.l.b16 %v815
    %v952 = vunpack.c.l.b16 %v816
    %v953 = vunpack.c.l.b16 %v817
    %v954 = vunpack.c.l.b16 %v818
    %v955 = vunpack.c.l.b16 %v819
    %v956 = vunpack.c.l.b16 %v820
    %v957 = vunpack.c.l.b16 %v821
    %v958 = vunpack.c.l.b16 %v822
    %v959 = vunpack.c.l.b16 %v823
    %v960 = vunpack.c.l.b16 %v824
    %v961 = vpack.c.b16 %v946, %v945
    %v962 = vpack.c.b16 %v948, %v947
    %v963 = vpack.c.b16 %v950, %v949
    %v964 = vpack.c.b16 %v952, %v951
    %v965 = vpack.c.b16 %v954, %v953
    %v966 = vpack.c.b16 %v956, %v955
    %v967 = vpack.c.b16 %v958, %v957
    %v968 = vpack.c.b16 %v960, %v959
    %977 = vmatpush.bf16.msra.mxu0 %v832
    %978 = vmatpush.bf16.msra.mxu0 %v831
    %979 = vmatpush.bf16.msra.mxu0 %v830
    %980 = vmatpush.bf16.msra.mxu0 %v829
    %981 = vmatpush.bf16.msra.mxu0 %v828
    %982 = vmatpush.bf16.msra.mxu0 %v827
    %983 = vmatpush.bf16.msra.mxu0 %v826
    %984 = vmatpush.bf16.msra.mxu0 %v825
    %985 = vmatmul.bf16.gmra.mxu0 %v961
    %v986 = vpop.f32.mrf.mxu0
    %v987 = vadd.f32 %v852, %v986
    %v988 = vpop.f32.mrf.mxu0
    %v989 = vadd.f32 %v857, %v988
    %990 = vmatmul.bf16.gmra.mxu0 %v962
    %v991 = vpop.f32.mrf.mxu0
    %v992 = vadd.f32 %v862, %v991
    %v993 = vpop.f32.mrf.mxu0
    %v994 = vadd.f32 %v867, %v993
    %995 = vmatmul.bf16.gmra.mxu0 %v963
    %v996 = vpop.f32.mrf.mxu0
    %v997 = vadd.f32 %v872, %v996
    %v998 = vpop.f32.mrf.mxu0
    %v999 = vadd.f32 %v877, %v998
    %1000 = vmatmul.bf16.gmra.mxu0 %v964
    %v1001 = vpop.f32.mrf.mxu0
    %v1002 = vadd.f32 %v882, %v1001
    %v1003 = vpop.f32.mrf.mxu0
    %v1004 = vadd.f32 %v887, %v1003
    %1005 = vmatmul.bf16.gmra.mxu0 %v965
    %v1006 = vpop.f32.mrf.mxu0
    %v1007 = vadd.f32 %v892, %v1006
    %v1008 = vpop.f32.mrf.mxu0
    %v1009 = vadd.f32 %v897, %v1008
    %1010 = vmatmul.bf16.gmra.mxu0 %v966
    %v1011 = vpop.f32.mrf.mxu0
    %v1012 = vadd.f32 %v902, %v1011
    %v1013 = vpop.f32.mrf.mxu0
    %v1014 = vadd.f32 %v907, %v1013
    %1015 = vmatmul.bf16.gmra.mxu0 %v967
    %v1016 = vpop.f32.mrf.mxu0
    %v1017 = vadd.f32 %v912, %v1016
    %v1018 = vpop.f32.mrf.mxu0
    %v1019 = vadd.f32 %v917, %v1018
    %1020 = vmatmul.bf16.gmra.mxu0 %v968
    %v1021 = vpop.f32.mrf.mxu0
    %v1022 = vadd.f32 %v922, %v1021
    %v1023 = vpop.f32.mrf.mxu0
    %v1024 = vadd.f32 %v927, %v1023
    %1025 = vdwg.mxu0
    %v1026 = vpack.c.bf16 %v989, %v987
    %v1027 = vpack.c.bf16 %v994, %v992
    %v1028 = vpack.c.bf16 %v999, %v997
    %v1029 = vpack.c.bf16 %v1004, %v1002
    %v1030 = vpack.c.bf16 %v1009, %v1007
    %v1031 = vpack.c.bf16 %v1014, %v1012
    %v1032 = vpack.c.bf16 %v1019, %v1017
    %v1033 = vpack.c.bf16 %v1024, %v1022
    %v1034 = vld [vmem:[%s6] sm:$0xff]
    %v1035 = vld [vmem:[%s6 + $0x8] sm:$0xff]
    %v1036 = vld [vmem:[%s6 + $0x10] sm:$0xff]
    %v1037 = vld [vmem:[%s6 + $0x18] sm:$0xff]
    %v1038 = vld [vmem:[%s6 + $0x20] sm:$0xff]
    %v1039 = vld [vmem:[%s6 + $0x28] sm:$0xff]
    %v1040 = vld [vmem:[%s6 + $0x30] sm:$0xff]
    %v1041 = vld [vmem:[%s6 + $0x38] sm:$0xff]
    %v1042 = vld [vmem:[%s6 + $0x40] sm:$0xff]
    %v1043 = vld [vmem:[%s6 + $0x48] sm:$0xff]
    %v1044 = vld [vmem:[%s6 + $0x50] sm:$0xff]
    %v1045 = vld [vmem:[%s6 + $0x58] sm:$0xff]
    %v1046 = vld [vmem:[%s6 + $0x60] sm:$0xff]
    %v1047 = vld [vmem:[%s6 + $0x68] sm:$0xff]
    %v1048 = vld [vmem:[%s6 + $0x70] sm:$0xff]
    %v1049 = vld [vmem:[%s6 + $0x78] sm:$0xff]
    %1051 = vset.pattern.permute.xlu0 0
    %1052 = vperm.xlu0 %1051, %v1034
    %v1053 = vpop.permute.xlu0 %1052
    %1056 = vset.pattern.permute.xlu0 0
    %1057 = vperm.xlu0 %1056, %v1035
    %v1058 = vpop.permute.xlu0 %1057
    %1061 = vset.pattern.permute.xlu0 0
    %1062 = vperm.xlu0 %1061, %v1036
    %v1063 = vpop.permute.xlu0 %1062
    %1066 = vset.pattern.permute.xlu0 0
    %1067 = vperm.xlu0 %1066, %v1037
    %v1068 = vpop.permute.xlu0 %1067
    %1071 = vset.pattern.permute.xlu0 0
    %1072 = vperm.xlu0 %1071, %v1038
    %v1073 = vpop.permute.xlu0 %1072
    %1076 = vset.pattern.permute.xlu0 0
    %1077 = vperm.xlu0 %1076, %v1039
    %v1078 = vpop.permute.xlu0 %1077
    %1081 = vset.pattern.permute.xlu0 0
    %1082 = vperm.xlu0 %1081, %v1040
    %v1083 = vpop.permute.xlu0 %1082
    %1086 = vset.pattern.permute.xlu0 0
    %1087 = vperm.xlu0 %1086, %v1041
    %v1088 = vpop.permute.xlu0 %1087
    %1091 = vset.pattern.permute.xlu0 0
    %1092 = vperm.xlu0 %1091, %v1042
    %v1093 = vpop.permute.xlu0 %1092
    %1096 = vset.pattern.permute.xlu0 0
    %1097 = vperm.xlu0 %1096, %v1043
    %v1098 = vpop.permute.xlu0 %1097
    %1101 = vset.pattern.permute.xlu0 0
    %1102 = vperm.xlu0 %1101, %v1044
    %v1103 = vpop.permute.xlu0 %1102
    %1106 = vset.pattern.permute.xlu0 0
    %1107 = vperm.xlu0 %1106, %v1045
    %v1108 = vpop.permute.xlu0 %1107
    %1111 = vset.pattern.permute.xlu0 0
    %1112 = vperm.xlu0 %1111, %v1046
    %v1113 = vpop.permute.xlu0 %1112
    %1116 = vset.pattern.permute.xlu0 0
    %1117 = vperm.xlu0 %1116, %v1047
    %v1118 = vpop.permute.xlu0 %1117
    %1121 = vset.pattern.permute.xlu0 0
    %1122 = vperm.xlu0 %1121, %v1048
    %v1123 = vpop.permute.xlu0 %1122
    %1126 = vset.pattern.permute.xlu0 0
    %1127 = vperm.xlu0 %1126, %v1049
    %v1128 = vpop.permute.xlu0 %1127
    %1130 = vmatpush.bf16.msra.mxu0 %v415
    %1131 = vmatpush.bf16.msra.mxu0 %v414
    %1132 = vmatpush.bf16.msra.mxu0 %v413
    %1133 = vmatpush.bf16.msra.mxu0 %v412
    %1134 = vmatpush.bf16.msra.mxu0 %v411
    %1135 = vmatpush.bf16.msra.mxu0 %v410
    %1136 = vmatpush.bf16.msra.mxu0 %v409
    %1137 = vmatpush.bf16.msra.mxu0 %v408
    %1138 = vmatmul.bf16.gmra.mxu0 %v1026
    %v1139 = vpop.f32.mrf.mxu0
    %v1140 = vadd.f32 %v1053, %v1139
    %v1141 = vpop.f32.mrf.mxu0
    %v1142 = vadd.f32 %v1058, %v1141
    %1143 = vmatmul.bf16.gmra.mxu0 %v1027
    %v1144 = vpop.f32.mrf.mxu0
    %v1145 = vadd.f32 %v1063, %v1144
    %v1146 = vpop.f32.mrf.mxu0
    %v1147 = vadd.f32 %v1068, %v1146
    %1148 = vmatmul.bf16.gmra.mxu0 %v1028
    %v1149 = vpop.f32.mrf.mxu0
    %v1150 = vadd.f32 %v1073, %v1149
    %v1151 = vpop.f32.mrf.mxu0
    %v1152 = vadd.f32 %v1078, %v1151
    %1153 = vmatmul.bf16.gmra.mxu0 %v1029
    %v1154 = vpop.f32.mrf.mxu0
    %v1155 = vadd.f32 %v1083, %v1154
    %v1156 = vpop.f32.mrf.mxu0
    %v1157 = vadd.f32 %v1088, %v1156
    %1158 = vmatmul.bf16.gmra.mxu0 %v1030
    %v1159 = vpop.f32.mrf.mxu0
    %v1160 = vadd.f32 %v1093, %v1159
    %v1161 = vpop.f32.mrf.mxu0
    %v1162 = vadd.f32 %v1098, %v1161
    %1163 = vmatmul.bf16.gmra.mxu0 %v1031
    %v1164 = vpop.f32.mrf.mxu0
    %v1165 = vadd.f32 %v1103, %v1164
    %v1166 = vpop.f32.mrf.mxu0
    %v1167 = vadd.f32 %v1108, %v1166
    %1168 = vmatmul.bf16.gmra.mxu0 %v1032
    %v1169 = vpop.f32.mrf.mxu0
    %v1170 = vadd.f32 %v1113, %v1169
    %v1171 = vpop.f32.mrf.mxu0
    %v1172 = vadd.f32 %v1118, %v1171
    %1173 = vmatmul.bf16.gmra.mxu0 %v1033
    %v1174 = vpop.f32.mrf.mxu0
    %v1175 = vadd.f32 %v1123, %v1174
    %v1176 = vpop.f32.mrf.mxu0
    %v1177 = vadd.f32 %v1128, %v1176
    %1178 = vdwg.mxu0
    %v1179 = vmax.f32 %v1140, 0.0
    %v1180 = vmax.f32 %v1142, 0.0
    %v1181 = vmax.f32 %v1145, 0.0
    %v1182 = vmax.f32 %v1147, 0.0
    %v1183 = vmax.f32 %v1150, 0.0
    %v1184 = vmax.f32 %v1152, 0.0
    %v1185 = vmax.f32 %v1155, 0.0
    %v1186 = vmax.f32 %v1157, 0.0
    %v1187 = vmax.f32 %v1160, 0.0
    %v1188 = vmax.f32 %v1162, 0.0
    %v1189 = vmax.f32 %v1165, 0.0
    %v1190 = vmax.f32 %v1167, 0.0
    %v1191 = vmax.f32 %v1170, 0.0
    %v1192 = vmax.f32 %v1172, 0.0
    %v1193 = vmax.f32 %v1175, 0.0
    %v1194 = vmax.f32 %v1177, 0.0
    %1195 = vadd.xlane.f32.xlu0 %v1179
    %v1196 = vpop.xlane.xlu0 %1195
    %1197 = vadd.xlane.f32.xlu0 %v1180
    %v1198 = vpop.xlane.xlu0 %1197
    %1199 = vadd.xlane.f32.xlu0 %v1181
    %v1200 = vpop.xlane.xlu0 %1199
    %1201 = vadd.xlane.f32.xlu0 %v1182
    %v1202 = vpop.xlane.xlu0 %1201
    %1203 = vadd.xlane.f32.xlu0 %v1183
    %v1204 = vpop.xlane.xlu0 %1203
    %1205 = vadd.xlane.f32.xlu0 %v1184
    %v1206 = vpop.xlane.xlu0 %1205
    %1207 = vadd.xlane.f32.xlu0 %v1185
    %v1208 = vpop.xlane.xlu0 %1207
    %1209 = vadd.xlane.f32.xlu0 %v1186
    %v1210 = vpop.xlane.xlu0 %1209
    %1211 = vadd.xlane.f32.xlu0 %v1187
    %v1212 = vpop.xlane.xlu0 %1211
    %1213 = vadd.xlane.f32.xlu0 %v1188
    %v1214 = vpop.xlane.xlu0 %1213
    %1215 = vadd.xlane.f32.xlu0 %v1189
    %v1216 = vpop.xlane.xlu0 %1215
    %1217 = vadd.xlane.f32.xlu0 %v1190
    %v1218 = vpop.xlane.xlu0 %1217
    %1219 = vadd.xlane.f32.xlu0 %v1191
    %v1220 = vpop.xlane.xlu0 %1219
    %1221 = vadd.xlane.f32.xlu0 %v1192
    %v1222 = vpop.xlane.xlu0 %1221
    %1223 = vadd.xlane.f32.xlu0 %v1193
    %v1224 = vpop.xlane.xlu0 %1223
    %1225 = vadd.xlane.f32.xlu0 %v1194
    %v1226 = vpop.xlane.xlu0 %1225
    %v1227 = vmul.f32 %v1196, 0.0078125
    %v1228 = vmul.f32 %v1198, 0.0078125
    %v1229 = vmul.f32 %v1200, 0.0078125
    %v1230 = vmul.f32 %v1202, 0.0078125
    %v1231 = vmul.f32 %v1204, 0.0078125
    %v1232 = vmul.f32 %v1206, 0.0078125
    %v1233 = vmul.f32 %v1208, 0.0078125
    %v1234 = vmul.f32 %v1210, 0.0078125
    %v1235 = vmul.f32 %v1212, 0.0078125
    %v1236 = vmul.f32 %v1214, 0.0078125
    %v1237 = vmul.f32 %v1216, 0.0078125
    %v1238 = vmul.f32 %v1218, 0.0078125
    %v1239 = vmul.f32 %v1220, 0.0078125
    %v1240 = vmul.f32 %v1222, 0.0078125
    %v1241 = vmul.f32 %v1224, 0.0078125
    %v1242 = vmul.f32 %v1226, 0.0078125
    %v1243 = vsub.f32 %v1179, %v1227
    %v1244 = vsub.f32 %v1180, %v1228
    %v1245 = vsub.f32 %v1181, %v1229
    %v1246 = vsub.f32 %v1182, %v1230
    %v1247 = vsub.f32 %v1183, %v1231
    %v1248 = vsub.f32 %v1184, %v1232
    %v1249 = vsub.f32 %v1185, %v1233
    %v1250 = vsub.f32 %v1186, %v1234
    %v1251 = vsub.f32 %v1187, %v1235
    %v1252 = vsub.f32 %v1188, %v1236
    %v1253 = vsub.f32 %v1189, %v1237
    %v1254 = vsub.f32 %v1190, %v1238
    %v1255 = vsub.f32 %v1191, %v1239
    %v1256 = vsub.f32 %v1192, %v1240
    %v1257 = vsub.f32 %v1193, %v1241
    %v1258 = vsub.f32 %v1194, %v1242
    %v1259 = vmul.f32 %v1243, %v1243
    %v1260 = vmul.f32 %v1244, %v1244
    %v1261 = vmul.f32 %v1245, %v1245
    %v1262 = vmul.f32 %v1246, %v1246
    %v1263 = vmul.f32 %v1247, %v1247
    %v1264 = vmul.f32 %v1248, %v1248
    %v1265 = vmul.f32 %v1249, %v1249
    %v1266 = vmul.f32 %v1250, %v1250
    %v1267 = vmul.f32 %v1251, %v1251
    %v1268 = vmul.f32 %v1252, %v1252
    %v1269 = vmul.f32 %v1253, %v1253
    %v1270 = vmul.f32 %v1254, %v1254
    %v1271 = vmul.f32 %v1255, %v1255
    %v1272 = vmul.f32 %v1256, %v1256
    %v1273 = vmul.f32 %v1257, %v1257
    %v1274 = vmul.f32 %v1258, %v1258
    %1275 = vadd.xlane.f32.xlu0 %v1259
    %v1276 = vpop.xlane.xlu0 %1275
    %1277 = vadd.xlane.f32.xlu0 %v1260
    %v1278 = vpop.xlane.xlu0 %1277
    %1279 = vadd.xlane.f32.xlu0 %v1261
    %v1280 = vpop.xlane.xlu0 %1279
    %1281 = vadd.xlane.f32.xlu0 %v1262
    %v1282 = vpop.xlane.xlu0 %1281
    %1283 = vadd.xlane.f32.xlu0 %v1263
    %v1284 = vpop.xlane.xlu0 %1283
    %1285 = vadd.xlane.f32.xlu0 %v1264
    %v1286 = vpop.xlane.xlu0 %1285
    %1287 = vadd.xlane.f32.xlu0 %v1265
    %v1288 = vpop.xlane.xlu0 %1287
    %1289 = vadd.xlane.f32.xlu0 %v1266
    %v1290 = vpop.xlane.xlu0 %1289
    %1291 = vadd.xlane.f32.xlu0 %v1267
    %v1292 = vpop.xlane.xlu0 %1291
    %1293 = vadd.xlane.f32.xlu0 %v1268
    %v1294 = vpop.xlane.xlu0 %1293
    %1295 = vadd.xlane.f32.xlu0 %v1269
    %v1296 = vpop.xlane.xlu0 %1295
    %1297 = vadd.xlane.f32.xlu0 %v1270
    %v1298 = vpop.xlane.xlu0 %1297
    %1299 = vadd.xlane.f32.xlu0 %v1271
    %v1300 = vpop.xlane.xlu0 %1299
    %1301 = vadd.xlane.f32.xlu0 %v1272
    %v1302 = vpop.xlane.xlu0 %1301
    %1303 = vadd.xlane.f32.xlu0 %v1273
    %v1304 = vpop.xlane.xlu0 %1303
    %1305 = vadd.xlane.f32.xlu0 %v1274
    %v1306 = vpop.xlane.xlu0 %1305
    %v1307 = vmul.f32 %v1276, 0.0078125
    %v1308 = vmul.f32 %v1278, 0.0078125
    %v1309 = vmul.f32 %v1280, 0.0078125
    %v1310 = vmul.f32 %v1282, 0.0078125
    %v1311 = vmul.f32 %v1284, 0.0078125
    %v1312 = vmul.f32 %v1286, 0.0078125
    %v1313 = vmul.f32 %v1288, 0.0078125
    %v1314 = vmul.f32 %v1290, 0.0078125
    %v1315 = vmul.f32 %v1292, 0.0078125
    %v1316 = vmul.f32 %v1294, 0.0078125
    %v1317 = vmul.f32 %v1296, 0.0078125
    %v1318 = vmul.f32 %v1298, 0.0078125
    %v1319 = vmul.f32 %v1300, 0.0078125
    %v1320 = vmul.f32 %v1302, 0.0078125
    %v1321 = vmul.f32 %v1304, 0.0078125
    %v1322 = vmul.f32 %v1306, 0.0078125
    %v1323 = vadd.f32 %v1307, 1e-05
    %v1324 = vadd.f32 %v1308, 1e-05
    %v1325 = vadd.f32 %v1309, 1e-05
    %v1326 = vadd.f32 %v1310, 1e-05
    %v1327 = vadd.f32 %v1311, 1e-05
    %v1328 = vadd.f32 %v1312, 1e-05
    %v1329 = vadd.f32 %v1313, 1e-05
    %v1330 = vadd.f32 %v1314, 1e-05
    %v1331 = vadd.f32 %v1315, 1e-05
    %v1332 = vadd.f32 %v1316, 1e-05
    %v1333 = vadd.f32 %v1317, 1e-05
    %v1334 = vadd.f32 %v1318, 1e-05
    %v1335 = vadd.f32 %v1319, 1e-05
    %v1336 = vadd.f32 %v1320, 1e-05
    %v1337 = vadd.f32 %v1321, 1e-05
    %v1338 = vadd.f32 %v1322, 1e-05
    %v1339 = vrsqrt.pop %v1323
    %v1340 = vmul.f32 %v1339, %v1323
    %v1341 = vmul.f32 %v1340, %v1339
    %v1342 = vmul.f32 0.5, %v1341
    %v1343 = vsub.f32 1.5, %v1342
    %v1344 = vmul.f32 %v1339, %v1343
    %vm1345 = vweird.f32 %v1323
    %vm1346 = vweird.f32 %v1339
    %vm1347 = vmor %vm1345, %vm1346
    %v1348 = vsel %vm1347, %v1339, %v1344
    %v1349 = vrsqrt.pop %v1324
    %v1350 = vmul.f32 %v1349, %v1324
    %v1351 = vmul.f32 %v1350, %v1349
    %v1352 = vmul.f32 0.5, %v1351
    %v1353 = vsub.f32 1.5, %v1352
    %v1354 = vmul.f32 %v1349, %v1353
    %vm1355 = vweird.f32 %v1324
    %vm1356 = vweird.f32 %v1349
    %vm1357 = vmor %vm1355, %vm1356
    %v1358 = vsel %vm1357, %v1349, %v1354
    %v1359 = vrsqrt.pop %v1325
    %v1360 = vmul.f32 %v1359, %v1325
    %v1361 = vmul.f32 %v1360, %v1359
    %v1362 = vmul.f32 0.5, %v1361
    %v1363 = vsub.f32 1.5, %v1362
    %v1364 = vmul.f32 %v1359, %v1363
    %vm1365 = vweird.f32 %v1325
    %vm1366 = vweird.f32 %v1359
    %vm1367 = vmor %vm1365, %vm1366
    %v1368 = vsel %vm1367, %v1359, %v1364
    %v1369 = vrsqrt.pop %v1326
    %v1370 = vmul.f32 %v1369, %v1326
    %v1371 = vmul.f32 %v1370, %v1369
    %v1372 = vmul.f32 0.5, %v1371
    %v1373 = vsub.f32 1.5, %v1372
    %v1374 = vmul.f32 %v1369, %v1373
    %vm1375 = vweird.f32 %v1326
    %vm1376 = vweird.f32 %v1369
    %vm1377 = vmor %vm1375, %vm1376
    %v1378 = vsel %vm1377, %v1369, %v1374
    %v1379 = vrsqrt.pop %v1327
    %v1380 = vmul.f32 %v1379, %v1327
    %v1381 = vmul.f32 %v1380, %v1379
    %v1382 = vmul.f32 0.5, %v1381
    %v1383 = vsub.f32 1.5, %v1382
    %v1384 = vmul.f32 %v1379, %v1383
    %vm1385 = vweird.f32 %v1327
    %vm1386 = vweird.f32 %v1379
    %vm1387 = vmor %vm1385, %vm1386
    %v1388 = vsel %vm1387, %v1379, %v1384
    %v1389 = vrsqrt.pop %v1328
    %v1390 = vmul.f32 %v1389, %v1328
    %v1391 = vmul.f32 %v1390, %v1389
    %v1392 = vmul.f32 0.5, %v1391
    %v1393 = vsub.f32 1.5, %v1392
    %v1394 = vmul.f32 %v1389, %v1393
    %vm1395 = vweird.f32 %v1328
    %vm1396 = vweird.f32 %v1389
    %vm1397 = vmor %vm1395, %vm1396
    %v1398 = vsel %vm1397, %v1389, %v1394
    %v1399 = vrsqrt.pop %v1329
    %v1400 = vmul.f32 %v1399, %v1329
    %v1401 = vmul.f32 %v1400, %v1399
    %v1402 = vmul.f32 0.5, %v1401
    %v1403 = vsub.f32 1.5, %v1402
    %v1404 = vmul.f32 %v1399, %v1403
    %vm1405 = vweird.f32 %v1329
    %vm1406 = vweird.f32 %v1399
    %vm1407 = vmor %vm1405, %vm1406
    %v1408 = vsel %vm1407, %v1399, %v1404
    %v1409 = vrsqrt.pop %v1330
    %v1410 = vmul.f32 %v1409, %v1330
    %v1411 = vmul.f32 %v1410, %v1409
    %v1412 = vmul.f32 0.5, %v1411
    %v1413 = vsub.f32 1.5, %v1412
    %v1414 = vmul.f32 %v1409, %v1413
    %vm1415 = vweird.f32 %v1330
    %vm1416 = vweird.f32 %v1409
    %vm1417 = vmor %vm1415, %vm1416
    %v1418 = vsel %vm1417, %v1409, %v1414
    %v1419 = vrsqrt.pop %v1331
    %v1420 = vmul.f32 %v1419, %v1331
    %v1421 = vmul.f32 %v1420, %v1419
    %v1422 = vmul.f32 0.5, %v1421
    %v1423 = vsub.f32 1.5, %v1422
    %v1424 = vmul.f32 %v1419, %v1423
    %vm1425 = vweird.f32 %v1331
    %vm1426 = vweird.f32 %v1419
    %vm1427 = vmor %vm1425, %vm1426
    %v1428 = vsel %vm1427, %v1419, %v1424
    %v1429 = vrsqrt.pop %v1332
    %v1430 = vmul.f32 %v1429, %v1332
    %v1431 = vmul.f32 %v1430, %v1429
    %v1432 = vmul.f32 0.5, %v1431
    %v1433 = vsub.f32 1.5, %v1432
    %v1434 = vmul.f32 %v1429, %v1433
    %vm1435 = vweird.f32 %v1332
    %vm1436 = vweird.f32 %v1429
    %vm1437 = vmor %vm1435, %vm1436
    %v1438 = vsel %vm1437, %v1429, %v1434
    %v1439 = vrsqrt.pop %v1333
    %v1440 = vmul.f32 %v1439, %v1333
    %v1441 = vmul.f32 %v1440, %v1439
    %v1442 = vmul.f32 0.5, %v1441
    %v1443 = vsub.f32 1.5, %v1442
    %v1444 = vmul.f32 %v1439, %v1443
    %vm1445 = vweird.f32 %v1333
    %vm1446 = vweird.f32 %v1439
    %vm1447 = vmor %vm1445, %vm1446
    %v1448 = vsel %vm1447, %v1439, %v1444
    %v1449 = vrsqrt.pop %v1334
    %v1450 = vmul.f32 %v1449, %v1334
    %v1451 = vmul.f32 %v1450, %v1449
    %v1452 = vmul.f32 0.5, %v1451
    %v1453 = vsub.f32 1.5, %v1452
    %v1454 = vmul.f32 %v1449, %v1453
    %vm1455 = vweird.f32 %v1334
    %vm1456 = vweird.f32 %v1449
    %vm1457 = vmor %vm1455, %vm1456
    %v1458 = vsel %vm1457, %v1449, %v1454
    %v1459 = vrsqrt.pop %v1335
    %v1460 = vmul.f32 %v1459, %v1335
    %v1461 = vmul.f32 %v1460, %v1459
    %v1462 = vmul.f32 0.5, %v1461
    %v1463 = vsub.f32 1.5, %v1462
    %v1464 = vmul.f32 %v1459, %v1463
    %vm1465 = vweird.f32 %v1335
    %vm1466 = vweird.f32 %v1459
    %vm1467 = vmor %vm1465, %vm1466
    %v1468 = vsel %vm1467, %v1459, %v1464
    %v1469 = vrsqrt.pop %v1336
    %v1470 = vmul.f32 %v1469, %v1336
    %v1471 = vmul.f32 %v1470, %v1469
    %v1472 = vmul.f32 0.5, %v1471
    %v1473 = vsub.f32 1.5, %v1472
    %v1474 = vmul.f32 %v1469, %v1473
    %vm1475 = vweird.f32 %v1336
    %vm1476 = vweird.f32 %v1469
    %vm1477 = vmor %vm1475, %vm1476
    %v1478 = vsel %vm1477, %v1469, %v1474
    %v1479 = vrsqrt.pop %v1337
    %v1480 = vmul.f32 %v1479, %v1337
    %v1481 = vmul.f32 %v1480, %v1479
    %v1482 = vmul.f32 0.5, %v1481
    %v1483 = vsub.f32 1.5, %v1482
    %v1484 = vmul.f32 %v1479, %v1483
    %vm1485 = vweird.f32 %v1337
    %vm1486 = vweird.f32 %v1479
    %vm1487 = vmor %vm1485, %vm1486
    %v1488 = vsel %vm1487, %v1479, %v1484
    %v1489 = vrsqrt.pop %v1338
    %v1490 = vmul.f32 %v1489, %v1338
    %v1491 = vmul.f32 %v1490, %v1489
    %v1492 = vmul.f32 0.5, %v1491
    %v1493 = vsub.f32 1.5, %v1492
    %v1494 = vmul.f32 %v1489, %v1493
    %vm1495 = vweird.f32 %v1338
    %vm1496 = vweird.f32 %v1489
    %vm1497 = vmor %vm1495, %vm1496
    %v1498 = vsel %vm1497, %v1489, %v1494
    %v1499 = vmul.f32 %v1243, %v1348
    %v1500 = vmul.f32 %v1244, %v1358
    %v1501 = vmul.f32 %v1245, %v1368
    %v1502 = vmul.f32 %v1246, %v1378
    %v1503 = vmul.f32 %v1247, %v1388
    %v1504 = vmul.f32 %v1248, %v1398
    %v1505 = vmul.f32 %v1249, %v1408
    %v1506 = vmul.f32 %v1250, %v1418
    %v1507 = vmul.f32 %v1251, %v1428
    %v1508 = vmul.f32 %v1252, %v1438
    %v1509 = vmul.f32 %v1253, %v1448
    %v1510 = vmul.f32 %v1254, %v1458
    %v1511 = vmul.f32 %v1255, %v1468
    %v1512 = vmul.f32 %v1256, %v1478
    %v1513 = vmul.f32 %v1257, %v1488
    %v1514 = vmul.f32 %v1258, %v1498
    %v1515 = vld [vmem:[%s7] sm:$0xf]
    %v1516 = vld [vmem:[%s7 + $0x4] sm:$0xf]
    %v1517 = vld [vmem:[%s7 + $0x8] sm:$0xf]
    %v1518 = vld [vmem:[%s7 + $0xc] sm:$0xf]
    %v1519 = vld [vmem:[%s7 + $0x10] sm:$0xf]
    %v1520 = vld [vmem:[%s7 + $0x14] sm:$0xf]
    %v1521 = vld [vmem:[%s7 + $0x18] sm:$0xf]
    %v1522 = vld [vmem:[%s7 + $0x1c] sm:$0xf]
    %v1523 = vld [vmem:[%s7 + $0x20] sm:$0xf]
    %v1524 = vld [vmem:[%s7 + $0x24] sm:$0xf]
    %v1525 = vld [vmem:[%s7 + $0x28] sm:$0xf]
    %v1526 = vld [vmem:[%s7 + $0x2c] sm:$0xf]
    %v1527 = vld [vmem:[%s7 + $0x30] sm:$0xf]
    %v1528 = vld [vmem:[%s7 + $0x34] sm:$0xf]
    %v1529 = vld [vmem:[%s7 + $0x38] sm:$0xf]
    %v1530 = vld [vmem:[%s7 + $0x3c] sm:$0xf]
    %v1531 = vpack.c.bf16 %v1500, %v1499
    %v1532 = vpack.c.bf16 %v1502, %v1501
    %v1533 = vpack.c.bf16 %v1504, %v1503
    %v1534 = vpack.c.bf16 %v1506, %v1505
    %v1535 = vpack.c.bf16 %v1508, %v1507
    %v1536 = vpack.c.bf16 %v1510, %v1509
    %v1537 = vpack.c.bf16 %v1512, %v1511
    %v1538 = vpack.c.bf16 %v1514, %v1513
    %v1539 = vld [vmem:[%s8] sm:$0xff]
    %v1540 = vld [vmem:[%s8 + $0x8] sm:$0xff]
    %v1541 = vld [vmem:[%s8 + $0x10] sm:$0xff]
    %v1542 = vld [vmem:[%s8 + $0x18] sm:$0xff]
    %v1543 = vld [vmem:[%s8 + $0x20] sm:$0xff]
    %v1544 = vld [vmem:[%s8 + $0x28] sm:$0xff]
    %v1545 = vld [vmem:[%s8 + $0x30] sm:$0xff]
    %v1546 = vld [vmem:[%s8 + $0x38] sm:$0xff]
    %v1547 = vld [vmem:[%s8 + $0x40] sm:$0xff]
    %v1548 = vld [vmem:[%s8 + $0x48] sm:$0xff]
    %v1549 = vld [vmem:[%s8 + $0x50] sm:$0xff]
    %v1550 = vld [vmem:[%s8 + $0x58] sm:$0xff]
    %v1551 = vld [vmem:[%s8 + $0x60] sm:$0xff]
    %v1552 = vld [vmem:[%s8 + $0x68] sm:$0xff]
    %v1553 = vld [vmem:[%s8 + $0x70] sm:$0xff]
    %v1554 = vld [vmem:[%s8 + $0x78] sm:$0xff]
    %1556 = vset.pattern.permute.xlu0 0
    %1557 = vperm.xlu0 %1556, %v1539
    %v1558 = vpop.permute.xlu0 %1557
    %1561 = vset.pattern.permute.xlu0 0
    %1562 = vperm.xlu0 %1561, %v1540
    %v1563 = vpop.permute.xlu0 %1562
    %1566 = vset.pattern.permute.xlu0 0
    %1567 = vperm.xlu0 %1566, %v1541
    %v1568 = vpop.permute.xlu0 %1567
    %1571 = vset.pattern.permute.xlu0 0
    %1572 = vperm.xlu0 %1571, %v1542
    %v1573 = vpop.permute.xlu0 %1572
    %1576 = vset.pattern.permute.xlu0 0
    %1577 = vperm.xlu0 %1576, %v1543
    %v1578 = vpop.permute.xlu0 %1577
    %1581 = vset.pattern.permute.xlu0 0
    %1582 = vperm.xlu0 %1581, %v1544
    %v1583 = vpop.permute.xlu0 %1582
    %1586 = vset.pattern.permute.xlu0 0
    %1587 = vperm.xlu0 %1586, %v1545
    %v1588 = vpop.permute.xlu0 %1587
    %1591 = vset.pattern.permute.xlu0 0
    %1592 = vperm.xlu0 %1591, %v1546
    %v1593 = vpop.permute.xlu0 %1592
    %1596 = vset.pattern.permute.xlu0 0
    %1597 = vperm.xlu0 %1596, %v1547
    %v1598 = vpop.permute.xlu0 %1597
    %1601 = vset.pattern.permute.xlu0 0
    %1602 = vperm.xlu0 %1601, %v1548
    %v1603 = vpop.permute.xlu0 %1602
    %1606 = vset.pattern.permute.xlu0 0
    %1607 = vperm.xlu0 %1606, %v1549
    %v1608 = vpop.permute.xlu0 %1607
    %1611 = vset.pattern.permute.xlu0 0
    %1612 = vperm.xlu0 %1611, %v1550
    %v1613 = vpop.permute.xlu0 %1612
    %1616 = vset.pattern.permute.xlu0 0
    %1617 = vperm.xlu0 %1616, %v1551
    %v1618 = vpop.permute.xlu0 %1617
    %1621 = vset.pattern.permute.xlu0 0
    %1622 = vperm.xlu0 %1621, %v1552
    %v1623 = vpop.permute.xlu0 %1622
    %1626 = vset.pattern.permute.xlu0 0
    %1627 = vperm.xlu0 %1626, %v1553
    %v1628 = vpop.permute.xlu0 %1627
    %1631 = vset.pattern.permute.xlu0 0
    %1632 = vperm.xlu0 %1631, %v1554
    %v1633 = vpop.permute.xlu0 %1632
    %v1651 = vunpack.c.l.b16 %v1515
    %v1652 = vunpack.c.l.b16 %v1516
    %v1653 = vunpack.c.l.b16 %v1517
    %v1654 = vunpack.c.l.b16 %v1518
    %v1655 = vunpack.c.l.b16 %v1519
    %v1656 = vunpack.c.l.b16 %v1520
    %v1657 = vunpack.c.l.b16 %v1521
    %v1658 = vunpack.c.l.b16 %v1522
    %v1659 = vunpack.c.l.b16 %v1523
    %v1660 = vunpack.c.l.b16 %v1524
    %v1661 = vunpack.c.l.b16 %v1525
    %v1662 = vunpack.c.l.b16 %v1526
    %v1663 = vunpack.c.l.b16 %v1527
    %v1664 = vunpack.c.l.b16 %v1528
    %v1665 = vunpack.c.l.b16 %v1529
    %v1666 = vunpack.c.l.b16 %v1530
    %v1667 = vpack.c.b16 %v1652, %v1651
    %v1668 = vpack.c.b16 %v1654, %v1653
    %v1669 = vpack.c.b16 %v1656, %v1655
    %v1670 = vpack.c.b16 %v1658, %v1657
    %v1671 = vpack.c.b16 %v1660, %v1659
    %v1672 = vpack.c.b16 %v1662, %v1661
    %v1673 = vpack.c.b16 %v1664, %v1663
    %v1674 = vpack.c.b16 %v1666, %v1665
    %1683 = vmatpush.bf16.msra.mxu0 %v1538
    %1684 = vmatpush.bf16.msra.mxu0 %v1537
    %1685 = vmatpush.bf16.msra.mxu0 %v1536
    %1686 = vmatpush.bf16.msra.mxu0 %v1535
    %1687 = vmatpush.bf16.msra.mxu0 %v1534
    %1688 = vmatpush.bf16.msra.mxu0 %v1533
    %1689 = vmatpush.bf16.msra.mxu0 %v1532
    %1690 = vmatpush.bf16.msra.mxu0 %v1531
    %1691 = vmatmul.bf16.gmra.mxu0 %v1667
    %v1692 = vpop.f32.mrf.mxu0
    %v1693 = vadd.f32 %v1558, %v1692
    %v1694 = vpop.f32.mrf.mxu0
    %v1695 = vadd.f32 %v1563, %v1694
    %1696 = vmatmul.bf16.gmra.mxu0 %v1668
    %v1697 = vpop.f32.mrf.mxu0
    %v1698 = vadd.f32 %v1568, %v1697
    %v1699 = vpop.f32.mrf.mxu0
    %v1700 = vadd.f32 %v1573, %v1699
    %1701 = vmatmul.bf16.gmra.mxu0 %v1669
    %v1702 = vpop.f32.mrf.mxu0
    %v1703 = vadd.f32 %v1578, %v1702
    %v1704 = vpop.f32.mrf.mxu0
    %v1705 = vadd.f32 %v1583, %v1704
    %1706 = vmatmul.bf16.gmra.mxu0 %v1670
    %v1707 = vpop.f32.mrf.mxu0
    %v1708 = vadd.f32 %v1588, %v1707
    %v1709 = vpop.f32.mrf.mxu0
    %v1710 = vadd.f32 %v1593, %v1709
    %1711 = vmatmul.bf16.gmra.mxu0 %v1671
    %v1712 = vpop.f32.mrf.mxu0
    %v1713 = vadd.f32 %v1598, %v1712
    %v1714 = vpop.f32.mrf.mxu0
    %v1715 = vadd.f32 %v1603, %v1714
    %1716 = vmatmul.bf16.gmra.mxu0 %v1672
    %v1717 = vpop.f32.mrf.mxu0
    %v1718 = vadd.f32 %v1608, %v1717
    %v1719 = vpop.f32.mrf.mxu0
    %v1720 = vadd.f32 %v1613, %v1719
    %1721 = vmatmul.bf16.gmra.mxu0 %v1673
    %v1722 = vpop.f32.mrf.mxu0
    %v1723 = vadd.f32 %v1618, %v1722
    %v1724 = vpop.f32.mrf.mxu0
    %v1725 = vadd.f32 %v1623, %v1724
    %1726 = vmatmul.bf16.gmra.mxu0 %v1674
    %v1727 = vpop.f32.mrf.mxu0
    %v1728 = vadd.f32 %v1628, %v1727
    %v1729 = vpop.f32.mrf.mxu0
    %v1730 = vadd.f32 %v1633, %v1729
    %1731 = vdwg.mxu0
    %v1732 = vpack.c.bf16 %v1695, %v1693
    %v1733 = vpack.c.bf16 %v1700, %v1698
    %v1734 = vpack.c.bf16 %v1705, %v1703
    %v1735 = vpack.c.bf16 %v1710, %v1708
    %v1736 = vpack.c.bf16 %v1715, %v1713
    %v1737 = vpack.c.bf16 %v1720, %v1718
    %v1738 = vpack.c.bf16 %v1725, %v1723
    %v1739 = vpack.c.bf16 %v1730, %v1728
    %v1740 = vld [vmem:[%s9] sm:$0xff]
    %v1741 = vld [vmem:[%s9 + $0x8] sm:$0xff]
    %v1742 = vld [vmem:[%s9 + $0x10] sm:$0xff]
    %v1743 = vld [vmem:[%s9 + $0x18] sm:$0xff]
    %v1744 = vld [vmem:[%s9 + $0x20] sm:$0xff]
    %v1745 = vld [vmem:[%s9 + $0x28] sm:$0xff]
    %v1746 = vld [vmem:[%s9 + $0x30] sm:$0xff]
    %v1747 = vld [vmem:[%s9 + $0x38] sm:$0xff]
    %v1748 = vld [vmem:[%s9 + $0x40] sm:$0xff]
    %v1749 = vld [vmem:[%s9 + $0x48] sm:$0xff]
    %v1750 = vld [vmem:[%s9 + $0x50] sm:$0xff]
    %v1751 = vld [vmem:[%s9 + $0x58] sm:$0xff]
    %v1752 = vld [vmem:[%s9 + $0x60] sm:$0xff]
    %v1753 = vld [vmem:[%s9 + $0x68] sm:$0xff]
    %v1754 = vld [vmem:[%s9 + $0x70] sm:$0xff]
    %v1755 = vld [vmem:[%s9 + $0x78] sm:$0xff]
    %1757 = vset.pattern.permute.xlu0 0
    %1758 = vperm.xlu0 %1757, %v1740
    %v1759 = vpop.permute.xlu0 %1758
    %1762 = vset.pattern.permute.xlu0 0
    %1763 = vperm.xlu0 %1762, %v1741
    %v1764 = vpop.permute.xlu0 %1763
    %1767 = vset.pattern.permute.xlu0 0
    %1768 = vperm.xlu0 %1767, %v1742
    %v1769 = vpop.permute.xlu0 %1768
    %1772 = vset.pattern.permute.xlu0 0
    %1773 = vperm.xlu0 %1772, %v1743
    %v1774 = vpop.permute.xlu0 %1773
    %1777 = vset.pattern.permute.xlu0 0
    %1778 = vperm.xlu0 %1777, %v1744
    %v1779 = vpop.permute.xlu0 %1778
    %1782 = vset.pattern.permute.xlu0 0
    %1783 = vperm.xlu0 %1782, %v1745
    %v1784 = vpop.permute.xlu0 %1783
    %1787 = vset.pattern.permute.xlu0 0
    %1788 = vperm.xlu0 %1787, %v1746
    %v1789 = vpop.permute.xlu0 %1788
    %1792 = vset.pattern.permute.xlu0 0
    %1793 = vperm.xlu0 %1792, %v1747
    %v1794 = vpop.permute.xlu0 %1793
    %1797 = vset.pattern.permute.xlu0 0
    %1798 = vperm.xlu0 %1797, %v1748
    %v1799 = vpop.permute.xlu0 %1798
    %1802 = vset.pattern.permute.xlu0 0
    %1803 = vperm.xlu0 %1802, %v1749
    %v1804 = vpop.permute.xlu0 %1803
    %1807 = vset.pattern.permute.xlu0 0
    %1808 = vperm.xlu0 %1807, %v1750
    %v1809 = vpop.permute.xlu0 %1808
    %1812 = vset.pattern.permute.xlu0 0
    %1813 = vperm.xlu0 %1812, %v1751
    %v1814 = vpop.permute.xlu0 %1813
    %1817 = vset.pattern.permute.xlu0 0
    %1818 = vperm.xlu0 %1817, %v1752
    %v1819 = vpop.permute.xlu0 %1818
    %1822 = vset.pattern.permute.xlu0 0
    %1823 = vperm.xlu0 %1822, %v1753
    %v1824 = vpop.permute.xlu0 %1823
    %1827 = vset.pattern.permute.xlu0 0
    %1828 = vperm.xlu0 %1827, %v1754
    %v1829 = vpop.permute.xlu0 %1828
    %1832 = vset.pattern.permute.xlu0 0
    %1833 = vperm.xlu0 %1832, %v1755
    %v1834 = vpop.permute.xlu0 %1833
    %1836 = vmatpush.bf16.msra.mxu0 %v415
    %1837 = vmatpush.bf16.msra.mxu0 %v414
    %1838 = vmatpush.bf16.msra.mxu0 %v413
    %1839 = vmatpush.bf16.msra.mxu0 %v412
    %1840 = vmatpush.bf16.msra.mxu0 %v411
    %1841 = vmatpush.bf16.msra.mxu0 %v410
    %1842 = vmatpush.bf16.msra.mxu0 %v409
    %1843 = vmatpush.bf16.msra.mxu0 %v408
    %1844 = vmatmul.bf16.gmra.mxu0 %v1732
    %v1845 = vpop.f32.mrf.mxu0
    %v1846 = vadd.f32 %v1759, %v1845
    %v1847 = vpop.f32.mrf.mxu0
    %v1848 = vadd.f32 %v1764, %v1847
    %1849 = vmatmul.bf16.gmra.mxu0 %v1733
    %v1850 = vpop.f32.mrf.mxu0
    %v1851 = vadd.f32 %v1769, %v1850
    %v1852 = vpop.f32.mrf.mxu0
    %v1853 = vadd.f32 %v1774, %v1852
    %1854 = vmatmul.bf16.gmra.mxu0 %v1734
    %v1855 = vpop.f32.mrf.mxu0
    %v1856 = vadd.f32 %v1779, %v1855
    %v1857 = vpop.f32.mrf.mxu0
    %v1858 = vadd.f32 %v1784, %v1857
    %1859 = vmatmul.bf16.gmra.mxu0 %v1735
    %v1860 = vpop.f32.mrf.mxu0
    %v1861 = vadd.f32 %v1789, %v1860
    %v1862 = vpop.f32.mrf.mxu0
    %v1863 = vadd.f32 %v1794, %v1862
    %1864 = vmatmul.bf16.gmra.mxu0 %v1736
    %v1865 = vpop.f32.mrf.mxu0
    %v1866 = vadd.f32 %v1799, %v1865
    %v1867 = vpop.f32.mrf.mxu0
    %v1868 = vadd.f32 %v1804, %v1867
    %1869 = vmatmul.bf16.gmra.mxu0 %v1737
    %v1870 = vpop.f32.mrf.mxu0
    %v1871 = vadd.f32 %v1809, %v1870
    %v1872 = vpop.f32.mrf.mxu0
    %v1873 = vadd.f32 %v1814, %v1872
    %1874 = vmatmul.bf16.gmra.mxu0 %v1738
    %v1875 = vpop.f32.mrf.mxu0
    %v1876 = vadd.f32 %v1819, %v1875
    %v1877 = vpop.f32.mrf.mxu0
    %v1878 = vadd.f32 %v1824, %v1877
    %1879 = vmatmul.bf16.gmra.mxu0 %v1739
    %v1880 = vpop.f32.mrf.mxu0
    %v1881 = vadd.f32 %v1829, %v1880
    %v1882 = vpop.f32.mrf.mxu0
    %v1883 = vadd.f32 %v1834, %v1882
    %1884 = vdwg.mxu0
    %v1885 = vmax.f32 %v1846, 0.0
    %v1886 = vmax.f32 %v1848, 0.0
    %v1887 = vmax.f32 %v1851, 0.0
    %v1888 = vmax.f32 %v1853, 0.0
    %v1889 = vmax.f32 %v1856, 0.0
    %v1890 = vmax.f32 %v1858, 0.0
    %v1891 = vmax.f32 %v1861, 0.0
    %v1892 = vmax.f32 %v1863, 0.0
    %v1893 = vmax.f32 %v1866, 0.0
    %v1894 = vmax.f32 %v1868, 0.0
    %v1895 = vmax.f32 %v1871, 0.0
    %v1896 = vmax.f32 %v1873, 0.0
    %v1897 = vmax.f32 %v1876, 0.0
    %v1898 = vmax.f32 %v1878, 0.0
    %v1899 = vmax.f32 %v1881, 0.0
    %v1900 = vmax.f32 %v1883, 0.0
    %1901 = vadd.xlane.f32.xlu0 %v1885
    %v1902 = vpop.xlane.xlu0 %1901
    %1903 = vadd.xlane.f32.xlu0 %v1886
    %v1904 = vpop.xlane.xlu0 %1903
    %1905 = vadd.xlane.f32.xlu0 %v1887
    %v1906 = vpop.xlane.xlu0 %1905
    %1907 = vadd.xlane.f32.xlu0 %v1888
    %v1908 = vpop.xlane.xlu0 %1907
    %1909 = vadd.xlane.f32.xlu0 %v1889
    %v1910 = vpop.xlane.xlu0 %1909
    %1911 = vadd.xlane.f32.xlu0 %v1890
    %v1912 = vpop.xlane.xlu0 %1911
    %1913 = vadd.xlane.f32.xlu0 %v1891
    %v1914 = vpop.xlane.xlu0 %1913
    %1915 = vadd.xlane.f32.xlu0 %v1892
    %v1916 = vpop.xlane.xlu0 %1915
    %1917 = vadd.xlane.f32.xlu0 %v1893
    %v1918 = vpop.xlane.xlu0 %1917
    %1919 = vadd.xlane.f32.xlu0 %v1894
    %v1920 = vpop.xlane.xlu0 %1919
    %1921 = vadd.xlane.f32.xlu0 %v1895
    %v1922 = vpop.xlane.xlu0 %1921
    %1923 = vadd.xlane.f32.xlu0 %v1896
    %v1924 = vpop.xlane.xlu0 %1923
    %1925 = vadd.xlane.f32.xlu0 %v1897
    %v1926 = vpop.xlane.xlu0 %1925
    %1927 = vadd.xlane.f32.xlu0 %v1898
    %v1928 = vpop.xlane.xlu0 %1927
    %1929 = vadd.xlane.f32.xlu0 %v1899
    %v1930 = vpop.xlane.xlu0 %1929
    %1931 = vadd.xlane.f32.xlu0 %v1900
    %v1932 = vpop.xlane.xlu0 %1931
    %v1933 = vmul.f32 %v1902, 0.0078125
    %v1934 = vmul.f32 %v1904, 0.0078125
    %v1935 = vmul.f32 %v1906, 0.0078125
    %v1936 = vmul.f32 %v1908, 0.0078125
    %v1937 = vmul.f32 %v1910, 0.0078125
    %v1938 = vmul.f32 %v1912, 0.0078125
    %v1939 = vmul.f32 %v1914, 0.0078125
    %v1940 = vmul.f32 %v1916, 0.0078125
    %v1941 = vmul.f32 %v1918, 0.0078125
    %v1942 = vmul.f32 %v1920, 0.0078125
    %v1943 = vmul.f32 %v1922, 0.0078125
    %v1944 = vmul.f32 %v1924, 0.0078125
    %v1945 = vmul.f32 %v1926, 0.0078125
    %v1946 = vmul.f32 %v1928, 0.0078125
    %v1947 = vmul.f32 %v1930, 0.0078125
    %v1948 = vmul.f32 %v1932, 0.0078125
    %v1949 = vsub.f32 %v1885, %v1933
    %v1950 = vsub.f32 %v1886, %v1934
    %v1951 = vsub.f32 %v1887, %v1935
    %v1952 = vsub.f32 %v1888, %v1936
    %v1953 = vsub.f32 %v1889, %v1937
    %v1954 = vsub.f32 %v1890, %v1938
    %v1955 = vsub.f32 %v1891, %v1939
    %v1956 = vsub.f32 %v1892, %v1940
    %v1957 = vsub.f32 %v1893, %v1941
    %v1958 = vsub.f32 %v1894, %v1942
    %v1959 = vsub.f32 %v1895, %v1943
    %v1960 = vsub.f32 %v1896, %v1944
    %v1961 = vsub.f32 %v1897, %v1945
    %v1962 = vsub.f32 %v1898, %v1946
    %v1963 = vsub.f32 %v1899, %v1947
    %v1964 = vsub.f32 %v1900, %v1948
    %v1965 = vmul.f32 %v1949, %v1949
    %v1966 = vmul.f32 %v1950, %v1950
    %v1967 = vmul.f32 %v1951, %v1951
    %v1968 = vmul.f32 %v1952, %v1952
    %v1969 = vmul.f32 %v1953, %v1953
    %v1970 = vmul.f32 %v1954, %v1954
    %v1971 = vmul.f32 %v1955, %v1955
    %v1972 = vmul.f32 %v1956, %v1956
    %v1973 = vmul.f32 %v1957, %v1957
    %v1974 = vmul.f32 %v1958, %v1958
    %v1975 = vmul.f32 %v1959, %v1959
    %v1976 = vmul.f32 %v1960, %v1960
    %v1977 = vmul.f32 %v1961, %v1961
    %v1978 = vmul.f32 %v1962, %v1962
    %v1979 = vmul.f32 %v1963, %v1963
    %v1980 = vmul.f32 %v1964, %v1964
    %1981 = vadd.xlane.f32.xlu0 %v1965
    %v1982 = vpop.xlane.xlu0 %1981
    %1983 = vadd.xlane.f32.xlu0 %v1966
    %v1984 = vpop.xlane.xlu0 %1983
    %1985 = vadd.xlane.f32.xlu0 %v1967
    %v1986 = vpop.xlane.xlu0 %1985
    %1987 = vadd.xlane.f32.xlu0 %v1968
    %v1988 = vpop.xlane.xlu0 %1987
    %1989 = vadd.xlane.f32.xlu0 %v1969
    %v1990 = vpop.xlane.xlu0 %1989
    %1991 = vadd.xlane.f32.xlu0 %v1970
    %v1992 = vpop.xlane.xlu0 %1991
    %1993 = vadd.xlane.f32.xlu0 %v1971
    %v1994 = vpop.xlane.xlu0 %1993
    %1995 = vadd.xlane.f32.xlu0 %v1972
    %v1996 = vpop.xlane.xlu0 %1995
    %1997 = vadd.xlane.f32.xlu0 %v1973
    %v1998 = vpop.xlane.xlu0 %1997
    %1999 = vadd.xlane.f32.xlu0 %v1974
    %v2000 = vpop.xlane.xlu0 %1999
    %2001 = vadd.xlane.f32.xlu0 %v1975
    %v2002 = vpop.xlane.xlu0 %2001
    %2003 = vadd.xlane.f32.xlu0 %v1976
    %v2004 = vpop.xlane.xlu0 %2003
    %2005 = vadd.xlane.f32.xlu0 %v1977
    %v2006 = vpop.xlane.xlu0 %2005
    %2007 = vadd.xlane.f32.xlu0 %v1978
    %v2008 = vpop.xlane.xlu0 %2007
    %2009 = vadd.xlane.f32.xlu0 %v1979
    %v2010 = vpop.xlane.xlu0 %2009
    %2011 = vadd.xlane.f32.xlu0 %v1980
    %v2012 = vpop.xlane.xlu0 %2011
    %v2013 = vmul.f32 %v1982, 0.0078125
    %v2014 = vmul.f32 %v1984, 0.0078125
    %v2015 = vmul.f32 %v1986, 0.0078125
    %v2016 = vmul.f32 %v1988, 0.0078125
    %v2017 = vmul.f32 %v1990, 0.0078125
    %v2018 = vmul.f32 %v1992, 0.0078125
    %v2019 = vmul.f32 %v1994, 0.0078125
    %v2020 = vmul.f32 %v1996, 0.0078125
    %v2021 = vmul.f32 %v1998, 0.0078125
    %v2022 = vmul.f32 %v2000, 0.0078125
    %v2023 = vmul.f32 %v2002, 0.0078125
    %v2024 = vmul.f32 %v2004, 0.0078125
    %v2025 = vmul.f32 %v2006, 0.0078125
    %v2026 = vmul.f32 %v2008, 0.0078125
    %v2027 = vmul.f32 %v2010, 0.0078125
    %v2028 = vmul.f32 %v2012, 0.0078125
    %v2029 = vadd.f32 %v2013, 1e-05
    %v2030 = vadd.f32 %v2014, 1e-05
    %v2031 = vadd.f32 %v2015, 1e-05
    %v2032 = vadd.f32 %v2016, 1e-05
    %v2033 = vadd.f32 %v2017, 1e-05
    %v2034 = vadd.f32 %v2018, 1e-05
    %v2035 = vadd.f32 %v2019, 1e-05
    %v2036 = vadd.f32 %v2020, 1e-05
    %v2037 = vadd.f32 %v2021, 1e-05
    %v2038 = vadd.f32 %v2022, 1e-05
    %v2039 = vadd.f32 %v2023, 1e-05
    %v2040 = vadd.f32 %v2024, 1e-05
    %v2041 = vadd.f32 %v2025, 1e-05
    %v2042 = vadd.f32 %v2026, 1e-05
    %v2043 = vadd.f32 %v2027, 1e-05
    %v2044 = vadd.f32 %v2028, 1e-05
    %v2045 = vrsqrt.pop %v2029
    %v2046 = vmul.f32 %v2045, %v2029
    %v2047 = vmul.f32 %v2046, %v2045
    %v2048 = vmul.f32 0.5, %v2047
    %v2049 = vsub.f32 1.5, %v2048
    %v2050 = vmul.f32 %v2045, %v2049
    %vm2051 = vweird.f32 %v2029
    %vm2052 = vweird.f32 %v2045
    %vm2053 = vmor %vm2051, %vm2052
    %v2054 = vsel %vm2053, %v2045, %v2050
    %v2055 = vrsqrt.pop %v2030
    %v2056 = vmul.f32 %v2055, %v2030
    %v2057 = vmul.f32 %v2056, %v2055
    %v2058 = vmul.f32 0.5, %v2057
    %v2059 = vsub.f32 1.5, %v2058
    %v2060 = vmul.f32 %v2055, %v2059
    %vm2061 = vweird.f32 %v2030
    %vm2062 = vweird.f32 %v2055
    %vm2063 = vmor %vm2061, %vm2062
    %v2064 = vsel %vm2063, %v2055, %v2060
    %v2065 = vrsqrt.pop %v2031
    %v2066 = vmul.f32 %v2065, %v2031
    %v2067 = vmul.f32 %v2066, %v2065
    %v2068 = vmul.f32 0.5, %v2067
    %v2069 = vsub.f32 1.5, %v2068
    %v2070 = vmul.f32 %v2065, %v2069
    %vm2071 = vweird.f32 %v2031
    %vm2072 = vweird.f32 %v2065
    %vm2073 = vmor %vm2071, %vm2072
    %v2074 = vsel %vm2073, %v2065, %v2070
    %v2075 = vrsqrt.pop %v2032
    %v2076 = vmul.f32 %v2075, %v2032
    %v2077 = vmul.f32 %v2076, %v2075
    %v2078 = vmul.f32 0.5, %v2077
    %v2079 = vsub.f32 1.5, %v2078
    %v2080 = vmul.f32 %v2075, %v2079
    %vm2081 = vweird.f32 %v2032
    %vm2082 = vweird.f32 %v2075
    %vm2083 = vmor %vm2081, %vm2082
    %v2084 = vsel %vm2083, %v2075, %v2080
    %v2085 = vrsqrt.pop %v2033
    %v2086 = vmul.f32 %v2085, %v2033
    %v2087 = vmul.f32 %v2086, %v2085
    %v2088 = vmul.f32 0.5, %v2087
    %v2089 = vsub.f32 1.5, %v2088
    %v2090 = vmul.f32 %v2085, %v2089
    %vm2091 = vweird.f32 %v2033
    %vm2092 = vweird.f32 %v2085
    %vm2093 = vmor %vm2091, %vm2092
    %v2094 = vsel %vm2093, %v2085, %v2090
    %v2095 = vrsqrt.pop %v2034
    %v2096 = vmul.f32 %v2095, %v2034
    %v2097 = vmul.f32 %v2096, %v2095
    %v2098 = vmul.f32 0.5, %v2097
    %v2099 = vsub.f32 1.5, %v2098
    %v2100 = vmul.f32 %v2095, %v2099
    %vm2101 = vweird.f32 %v2034
    %vm2102 = vweird.f32 %v2095
    %vm2103 = vmor %vm2101, %vm2102
    %v2104 = vsel %vm2103, %v2095, %v2100
    %v2105 = vrsqrt.pop %v2035
    %v2106 = vmul.f32 %v2105, %v2035
    %v2107 = vmul.f32 %v2106, %v2105
    %v2108 = vmul.f32 0.5, %v2107
    %v2109 = vsub.f32 1.5, %v2108
    %v2110 = vmul.f32 %v2105, %v2109
    %vm2111 = vweird.f32 %v2035
    %vm2112 = vweird.f32 %v2105
    %vm2113 = vmor %vm2111, %vm2112
    %v2114 = vsel %vm2113, %v2105, %v2110
    %v2115 = vrsqrt.pop %v2036
    %v2116 = vmul.f32 %v2115, %v2036
    %v2117 = vmul.f32 %v2116, %v2115
    %v2118 = vmul.f32 0.5, %v2117
    %v2119 = vsub.f32 1.5, %v2118
    %v2120 = vmul.f32 %v2115, %v2119
    %vm2121 = vweird.f32 %v2036
    %vm2122 = vweird.f32 %v2115
    %vm2123 = vmor %vm2121, %vm2122
    %v2124 = vsel %vm2123, %v2115, %v2120
    %v2125 = vrsqrt.pop %v2037
    %v2126 = vmul.f32 %v2125, %v2037
    %v2127 = vmul.f32 %v2126, %v2125
    %v2128 = vmul.f32 0.5, %v2127
    %v2129 = vsub.f32 1.5, %v2128
    %v2130 = vmul.f32 %v2125, %v2129
    %vm2131 = vweird.f32 %v2037
    %vm2132 = vweird.f32 %v2125
    %vm2133 = vmor %vm2131, %vm2132
    %v2134 = vsel %vm2133, %v2125, %v2130
    %v2135 = vrsqrt.pop %v2038
    %v2136 = vmul.f32 %v2135, %v2038
    %v2137 = vmul.f32 %v2136, %v2135
    %v2138 = vmul.f32 0.5, %v2137
    %v2139 = vsub.f32 1.5, %v2138
    %v2140 = vmul.f32 %v2135, %v2139
    %vm2141 = vweird.f32 %v2038
    %vm2142 = vweird.f32 %v2135
    %vm2143 = vmor %vm2141, %vm2142
    %v2144 = vsel %vm2143, %v2135, %v2140
    %v2145 = vrsqrt.pop %v2039
    %v2146 = vmul.f32 %v2145, %v2039
    %v2147 = vmul.f32 %v2146, %v2145
    %v2148 = vmul.f32 0.5, %v2147
    %v2149 = vsub.f32 1.5, %v2148
    %v2150 = vmul.f32 %v2145, %v2149
    %vm2151 = vweird.f32 %v2039
    %vm2152 = vweird.f32 %v2145
    %vm2153 = vmor %vm2151, %vm2152
    %v2154 = vsel %vm2153, %v2145, %v2150
    %v2155 = vrsqrt.pop %v2040
    %v2156 = vmul.f32 %v2155, %v2040
    %v2157 = vmul.f32 %v2156, %v2155
    %v2158 = vmul.f32 0.5, %v2157
    %v2159 = vsub.f32 1.5, %v2158
    %v2160 = vmul.f32 %v2155, %v2159
    %vm2161 = vweird.f32 %v2040
    %vm2162 = vweird.f32 %v2155
    %vm2163 = vmor %vm2161, %vm2162
    %v2164 = vsel %vm2163, %v2155, %v2160
    %v2165 = vrsqrt.pop %v2041
    %v2166 = vmul.f32 %v2165, %v2041
    %v2167 = vmul.f32 %v2166, %v2165
    %v2168 = vmul.f32 0.5, %v2167
    %v2169 = vsub.f32 1.5, %v2168
    %v2170 = vmul.f32 %v2165, %v2169
    %vm2171 = vweird.f32 %v2041
    %vm2172 = vweird.f32 %v2165
    %vm2173 = vmor %vm2171, %vm2172
    %v2174 = vsel %vm2173, %v2165, %v2170
    %v2175 = vrsqrt.pop %v2042
    %v2176 = vmul.f32 %v2175, %v2042
    %v2177 = vmul.f32 %v2176, %v2175
    %v2178 = vmul.f32 0.5, %v2177
    %v2179 = vsub.f32 1.5, %v2178
    %v2180 = vmul.f32 %v2175, %v2179
    %vm2181 = vweird.f32 %v2042
    %vm2182 = vweird.f32 %v2175
    %vm2183 = vmor %vm2181, %vm2182
    %v2184 = vsel %vm2183, %v2175, %v2180
    %v2185 = vrsqrt.pop %v2043
    %v2186 = vmul.f32 %v2185, %v2043
    %v2187 = vmul.f32 %v2186, %v2185
    %v2188 = vmul.f32 0.5, %v2187
    %v2189 = vsub.f32 1.5, %v2188
    %v2190 = vmul.f32 %v2185, %v2189
    %vm2191 = vweird.f32 %v2043
    %vm2192 = vweird.f32 %v2185
    %vm2193 = vmor %vm2191, %vm2192
    %v2194 = vsel %vm2193, %v2185, %v2190
    %v2195 = vrsqrt.pop %v2044
    %v2196 = vmul.f32 %v2195, %v2044
    %v2197 = vmul.f32 %v2196, %v2195
    %v2198 = vmul.f32 0.5, %v2197
    %v2199 = vsub.f32 1.5, %v2198
    %v2200 = vmul.f32 %v2195, %v2199
    %vm2201 = vweird.f32 %v2044
    %vm2202 = vweird.f32 %v2195
    %vm2203 = vmor %vm2201, %vm2202
    %v2204 = vsel %vm2203, %v2195, %v2200
    %v2205 = vmul.f32 %v1949, %v2054
    %v2206 = vmul.f32 %v1950, %v2064
    %v2207 = vmul.f32 %v1951, %v2074
    %v2208 = vmul.f32 %v1952, %v2084
    %v2209 = vmul.f32 %v1953, %v2094
    %v2210 = vmul.f32 %v1954, %v2104
    %v2211 = vmul.f32 %v1955, %v2114
    %v2212 = vmul.f32 %v1956, %v2124
    %v2213 = vmul.f32 %v1957, %v2134
    %v2214 = vmul.f32 %v1958, %v2144
    %v2215 = vmul.f32 %v1959, %v2154
    %v2216 = vmul.f32 %v1960, %v2164
    %v2217 = vmul.f32 %v1961, %v2174
    %v2218 = vmul.f32 %v1962, %v2184
    %v2219 = vmul.f32 %v1963, %v2194
    %v2220 = vmul.f32 %v1964, %v2204
    %v2221 = vld [vmem:[%s10] sm:$0xf]
    %v2222 = vld [vmem:[%s10 + $0x4] sm:$0xf]
    %v2223 = vld [vmem:[%s10 + $0x8] sm:$0xf]
    %v2224 = vld [vmem:[%s10 + $0xc] sm:$0xf]
    %v2225 = vld [vmem:[%s10 + $0x10] sm:$0xf]
    %v2226 = vld [vmem:[%s10 + $0x14] sm:$0xf]
    %v2227 = vld [vmem:[%s10 + $0x18] sm:$0xf]
    %v2228 = vld [vmem:[%s10 + $0x1c] sm:$0xf]
    %v2229 = vld [vmem:[%s10 + $0x20] sm:$0xf]
    %v2230 = vld [vmem:[%s10 + $0x24] sm:$0xf]
    %v2231 = vld [vmem:[%s10 + $0x28] sm:$0xf]
    %v2232 = vld [vmem:[%s10 + $0x2c] sm:$0xf]
    %v2233 = vld [vmem:[%s10 + $0x30] sm:$0xf]
    %v2234 = vld [vmem:[%s10 + $0x34] sm:$0xf]
    %v2235 = vld [vmem:[%s10 + $0x38] sm:$0xf]
    %v2236 = vld [vmem:[%s10 + $0x3c] sm:$0xf]
    %v2237 = vpack.c.bf16 %v2206, %v2205
    %v2238 = vpack.c.bf16 %v2208, %v2207
    %v2239 = vpack.c.bf16 %v2210, %v2209
    %v2240 = vpack.c.bf16 %v2212, %v2211
    %v2241 = vpack.c.bf16 %v2214, %v2213
    %v2242 = vpack.c.bf16 %v2216, %v2215
    %v2243 = vpack.c.bf16 %v2218, %v2217
    %v2244 = vpack.c.bf16 %v2220, %v2219
    %v2245 = vld [vmem:[%s11] sm:$0xff]
    %v2246 = vld [vmem:[%s11 + $0x8] sm:$0xff]
    %v2247 = vld [vmem:[%s11 + $0x10] sm:$0xff]
    %v2248 = vld [vmem:[%s11 + $0x18] sm:$0xff]
    %v2249 = vld [vmem:[%s11 + $0x20] sm:$0xff]
    %v2250 = vld [vmem:[%s11 + $0x28] sm:$0xff]
    %v2251 = vld [vmem:[%s11 + $0x30] sm:$0xff]
    %v2252 = vld [vmem:[%s11 + $0x38] sm:$0xff]
    %v2253 = vld [vmem:[%s11 + $0x40] sm:$0xff]
    %v2254 = vld [vmem:[%s11 + $0x48] sm:$0xff]
    %v2255 = vld [vmem:[%s11 + $0x50] sm:$0xff]
    %v2256 = vld [vmem:[%s11 + $0x58] sm:$0xff]
    %v2257 = vld [vmem:[%s11 + $0x60] sm:$0xff]
    %v2258 = vld [vmem:[%s11 + $0x68] sm:$0xff]
    %v2259 = vld [vmem:[%s11 + $0x70] sm:$0xff]
    %v2260 = vld [vmem:[%s11 + $0x78] sm:$0xff]
    %2262 = vset.pattern.permute.xlu0 0
    %2263 = vperm.xlu0 %2262, %v2245
    %v2264 = vpop.permute.xlu0 %2263
    %2267 = vset.pattern.permute.xlu0 0
    %2268 = vperm.xlu0 %2267, %v2246
    %v2269 = vpop.permute.xlu0 %2268
    %2272 = vset.pattern.permute.xlu0 0
    %2273 = vperm.xlu0 %2272, %v2247
    %v2274 = vpop.permute.xlu0 %2273
    %2277 = vset.pattern.permute.xlu0 0
    %2278 = vperm.xlu0 %2277, %v2248
    %v2279 = vpop.permute.xlu0 %2278
    %2282 = vset.pattern.permute.xlu0 0
    %2283 = vperm.xlu0 %2282, %v2249
    %v2284 = vpop.permute.xlu0 %2283
    %2287 = vset.pattern.permute.xlu0 0
    %2288 = vperm.xlu0 %2287, %v2250
    %v2289 = vpop.permute.xlu0 %2288
    %2292 = vset.pattern.permute.xlu0 0
    %2293 = vperm.xlu0 %2292, %v2251
    %v2294 = vpop.permute.xlu0 %2293
    %2297 = vset.pattern.permute.xlu0 0
    %2298 = vperm.xlu0 %2297, %v2252
    %v2299 = vpop.permute.xlu0 %2298
    %2302 = vset.pattern.permute.xlu0 0
    %2303 = vperm.xlu0 %2302, %v2253
    %v2304 = vpop.permute.xlu0 %2303
    %2307 = vset.pattern.permute.xlu0 0
    %2308 = vperm.xlu0 %2307, %v2254
    %v2309 = vpop.permute.xlu0 %2308
    %2312 = vset.pattern.permute.xlu0 0
    %2313 = vperm.xlu0 %2312, %v2255
    %v2314 = vpop.permute.xlu0 %2313
    %2317 = vset.pattern.permute.xlu0 0
    %2318 = vperm.xlu0 %2317, %v2256
    %v2319 = vpop.permute.xlu0 %2318
    %2322 = vset.pattern.permute.xlu0 0
    %2323 = vperm.xlu0 %2322, %v2257
    %v2324 = vpop.permute.xlu0 %2323
    %2327 = vset.pattern.permute.xlu0 0
    %2328 = vperm.xlu0 %2327, %v2258
    %v2329 = vpop.permute.xlu0 %2328
    %2332 = vset.pattern.permute.xlu0 0
    %2333 = vperm.xlu0 %2332, %v2259
    %v2334 = vpop.permute.xlu0 %2333
    %2337 = vset.pattern.permute.xlu0 0
    %2338 = vperm.xlu0 %2337, %v2260
    %v2339 = vpop.permute.xlu0 %2338
    %v2357 = vunpack.c.l.b16 %v2221
    %v2358 = vunpack.c.l.b16 %v2222
    %v2359 = vunpack.c.l.b16 %v2223
    %v2360 = vunpack.c.l.b16 %v2224
    %v2361 = vunpack.c.l.b16 %v2225
    %v2362 = vunpack.c.l.b16 %v2226
    %v2363 = vunpack.c.l.b16 %v2227
    %v2364 = vunpack.c.l.b16 %v2228
    %v2365 = vunpack.c.l.b16 %v2229
    %v2366 = vunpack.c.l.b16 %v2230
    %v2367 = vunpack.c.l.b16 %v2231
    %v2368 = vunpack.c.l.b16 %v2232
    %v2369 = vunpack.c.l.b16 %v2233
    %v2370 = vunpack.c.l.b16 %v2234
    %v2371 = vunpack.c.l.b16 %v2235
    %v2372 = vunpack.c.l.b16 %v2236
    %v2373 = vpack.c.b16 %v2358, %v2357
    %v2374 = vpack.c.b16 %v2360, %v2359
    %v2375 = vpack.c.b16 %v2362, %v2361
    %v2376 = vpack.c.b16 %v2364, %v2363
    %v2377 = vpack.c.b16 %v2366, %v2365
    %v2378 = vpack.c.b16 %v2368, %v2367
    %v2379 = vpack.c.b16 %v2370, %v2369
    %v2380 = vpack.c.b16 %v2372, %v2371
    %2389 = vmatpush.bf16.msra.mxu0 %v2244
    %2390 = vmatpush.bf16.msra.mxu0 %v2243
    %2391 = vmatpush.bf16.msra.mxu0 %v2242
    %2392 = vmatpush.bf16.msra.mxu0 %v2241
    %2393 = vmatpush.bf16.msra.mxu0 %v2240
    %2394 = vmatpush.bf16.msra.mxu0 %v2239
    %2395 = vmatpush.bf16.msra.mxu0 %v2238
    %2396 = vmatpush.bf16.msra.mxu0 %v2237
    %2397 = vmatmul.bf16.gmra.mxu0 %v2373
    %v2398 = vpop.f32.mrf.mxu0
    %v2399 = vadd.f32 %v2264, %v2398
    %v2400 = vpop.f32.mrf.mxu0
    %v2401 = vadd.f32 %v2269, %v2400
    %2402 = vmatmul.bf16.gmra.mxu0 %v2374
    %v2403 = vpop.f32.mrf.mxu0
    %v2404 = vadd.f32 %v2274, %v2403
    %v2405 = vpop.f32.mrf.mxu0
    %v2406 = vadd.f32 %v2279, %v2405
    %2407 = vmatmul.bf16.gmra.mxu0 %v2375
    %v2408 = vpop.f32.mrf.mxu0
    %v2409 = vadd.f32 %v2284, %v2408
    %v2410 = vpop.f32.mrf.mxu0
    %v2411 = vadd.f32 %v2289, %v2410
    %2412 = vmatmul.bf16.gmra.mxu0 %v2376
    %v2413 = vpop.f32.mrf.mxu0
    %v2414 = vadd.f32 %v2294, %v2413
    %v2415 = vpop.f32.mrf.mxu0
    %v2416 = vadd.f32 %v2299, %v2415
    %2417 = vmatmul.bf16.gmra.mxu0 %v2377
    %v2418 = vpop.f32.mrf.mxu0
    %v2419 = vadd.f32 %v2304, %v2418
    %v2420 = vpop.f32.mrf.mxu0
    %v2421 = vadd.f32 %v2309, %v2420
    %2422 = vmatmul.bf16.gmra.mxu0 %v2378
    %v2423 = vpop.f32.mrf.mxu0
    %v2424 = vadd.f32 %v2314, %v2423
    %v2425 = vpop.f32.mrf.mxu0
    %v2426 = vadd.f32 %v2319, %v2425
    %2427 = vmatmul.bf16.gmra.mxu0 %v2379
    %v2428 = vpop.f32.mrf.mxu0
    %v2429 = vadd.f32 %v2324, %v2428
    %v2430 = vpop.f32.mrf.mxu0
    %v2431 = vadd.f32 %v2329, %v2430
    %2432 = vmatmul.bf16.gmra.mxu0 %v2380
    %v2433 = vpop.f32.mrf.mxu0
    %v2434 = vadd.f32 %v2334, %v2433
    %v2435 = vpop.f32.mrf.mxu0
    %v2436 = vadd.f32 %v2339, %v2435
    %2437 = vdwg.mxu0
    %v2438 = vpack.c.bf16 %v2401, %v2399
    %v2439 = vpack.c.bf16 %v2406, %v2404
    %v2440 = vpack.c.bf16 %v2411, %v2409
    %v2441 = vpack.c.bf16 %v2416, %v2414
    %v2442 = vpack.c.bf16 %v2421, %v2419
    %v2443 = vpack.c.bf16 %v2426, %v2424
    %v2444 = vpack.c.bf16 %v2431, %v2429
    %v2445 = vpack.c.bf16 %v2436, %v2434
    %v2446 = vld [vmem:[%s12] sm:$0xff]
    %v2447 = vld [vmem:[%s12 + $0x8] sm:$0xff]
    %v2448 = vld [vmem:[%s12 + $0x10] sm:$0xff]
    %v2449 = vld [vmem:[%s12 + $0x18] sm:$0xff]
    %v2450 = vld [vmem:[%s12 + $0x20] sm:$0xff]
    %v2451 = vld [vmem:[%s12 + $0x28] sm:$0xff]
    %v2452 = vld [vmem:[%s12 + $0x30] sm:$0xff]
    %v2453 = vld [vmem:[%s12 + $0x38] sm:$0xff]
    %v2454 = vld [vmem:[%s12 + $0x40] sm:$0xff]
    %v2455 = vld [vmem:[%s12 + $0x48] sm:$0xff]
    %v2456 = vld [vmem:[%s12 + $0x50] sm:$0xff]
    %v2457 = vld [vmem:[%s12 + $0x58] sm:$0xff]
    %v2458 = vld [vmem:[%s12 + $0x60] sm:$0xff]
    %v2459 = vld [vmem:[%s12 + $0x68] sm:$0xff]
    %v2460 = vld [vmem:[%s12 + $0x70] sm:$0xff]
    %v2461 = vld [vmem:[%s12 + $0x78] sm:$0xff]
    %2463 = vset.pattern.permute.xlu0 0
    %2464 = vperm.xlu0 %2463, %v2446
    %v2465 = vpop.permute.xlu0 %2464
    %2468 = vset.pattern.permute.xlu0 0
    %2469 = vperm.xlu0 %2468, %v2447
    %v2470 = vpop.permute.xlu0 %2469
    %2473 = vset.pattern.permute.xlu0 0
    %2474 = vperm.xlu0 %2473, %v2448
    %v2475 = vpop.permute.xlu0 %2474
    %2478 = vset.pattern.permute.xlu0 0
    %2479 = vperm.xlu0 %2478, %v2449
    %v2480 = vpop.permute.xlu0 %2479
    %2483 = vset.pattern.permute.xlu0 0
    %2484 = vperm.xlu0 %2483, %v2450
    %v2485 = vpop.permute.xlu0 %2484
    %2488 = vset.pattern.permute.xlu0 0
    %2489 = vperm.xlu0 %2488, %v2451
    %v2490 = vpop.permute.xlu0 %2489
    %2493 = vset.pattern.permute.xlu0 0
    %2494 = vperm.xlu0 %2493, %v2452
    %v2495 = vpop.permute.xlu0 %2494
    %2498 = vset.pattern.permute.xlu0 0
    %2499 = vperm.xlu0 %2498, %v2453
    %v2500 = vpop.permute.xlu0 %2499
    %2503 = vset.pattern.permute.xlu0 0
    %2504 = vperm.xlu0 %2503, %v2454
    %v2505 = vpop.permute.xlu0 %2504
    %2508 = vset.pattern.permute.xlu0 0
    %2509 = vperm.xlu0 %2508, %v2455
    %v2510 = vpop.permute.xlu0 %2509
    %2513 = vset.pattern.permute.xlu0 0
    %2514 = vperm.xlu0 %2513, %v2456
    %v2515 = vpop.permute.xlu0 %2514
    %2518 = vset.pattern.permute.xlu0 0
    %2519 = vperm.xlu0 %2518, %v2457
    %v2520 = vpop.permute.xlu0 %2519
    %2523 = vset.pattern.permute.xlu0 0
    %2524 = vperm.xlu0 %2523, %v2458
    %v2525 = vpop.permute.xlu0 %2524
    %2528 = vset.pattern.permute.xlu0 0
    %2529 = vperm.xlu0 %2528, %v2459
    %v2530 = vpop.permute.xlu0 %2529
    %2533 = vset.pattern.permute.xlu0 0
    %2534 = vperm.xlu0 %2533, %v2460
    %v2535 = vpop.permute.xlu0 %2534
    %2538 = vset.pattern.permute.xlu0 0
    %2539 = vperm.xlu0 %2538, %v2461
    %v2540 = vpop.permute.xlu0 %2539
    %2542 = vmatpush.bf16.msra.mxu0 %v415
    %2543 = vmatpush.bf16.msra.mxu0 %v414
    %2544 = vmatpush.bf16.msra.mxu0 %v413
    %2545 = vmatpush.bf16.msra.mxu0 %v412
    %2546 = vmatpush.bf16.msra.mxu0 %v411
    %2547 = vmatpush.bf16.msra.mxu0 %v410
    %2548 = vmatpush.bf16.msra.mxu0 %v409
    %2549 = vmatpush.bf16.msra.mxu0 %v408
    %2550 = vmatmul.bf16.gmra.mxu0 %v2438
    %v2551 = vpop.f32.mrf.mxu0
    %v2552 = vadd.f32 %v2465, %v2551
    %v2553 = vpop.f32.mrf.mxu0
    %v2554 = vadd.f32 %v2470, %v2553
    %2555 = vmatmul.bf16.gmra.mxu0 %v2439
    %v2556 = vpop.f32.mrf.mxu0
    %v2557 = vadd.f32 %v2475, %v2556
    %v2558 = vpop.f32.mrf.mxu0
    %v2559 = vadd.f32 %v2480, %v2558
    %2560 = vmatmul.bf16.gmra.mxu0 %v2440
    %v2561 = vpop.f32.mrf.mxu0
    %v2562 = vadd.f32 %v2485, %v2561
    %v2563 = vpop.f32.mrf.mxu0
    %v2564 = vadd.f32 %v2490, %v2563
    %2565 = vmatmul.bf16.gmra.mxu0 %v2441
    %v2566 = vpop.f32.mrf.mxu0
    %v2567 = vadd.f32 %v2495, %v2566
    %v2568 = vpop.f32.mrf.mxu0
    %v2569 = vadd.f32 %v2500, %v2568
    %2570 = vmatmul.bf16.gmra.mxu0 %v2442
    %v2571 = vpop.f32.mrf.mxu0
    %v2572 = vadd.f32 %v2505, %v2571
    %v2573 = vpop.f32.mrf.mxu0
    %v2574 = vadd.f32 %v2510, %v2573
    %2575 = vmatmul.bf16.gmra.mxu0 %v2443
    %v2576 = vpop.f32.mrf.mxu0
    %v2577 = vadd.f32 %v2515, %v2576
    %v2578 = vpop.f32.mrf.mxu0
    %v2579 = vadd.f32 %v2520, %v2578
    %2580 = vmatmul.bf16.gmra.mxu0 %v2444
    %v2581 = vpop.f32.mrf.mxu0
    %v2582 = vadd.f32 %v2525, %v2581
    %v2583 = vpop.f32.mrf.mxu0
    %v2584 = vadd.f32 %v2530, %v2583
    %2585 = vmatmul.bf16.gmra.mxu0 %v2445
    %v2586 = vpop.f32.mrf.mxu0
    %v2587 = vadd.f32 %v2535, %v2586
    %v2588 = vpop.f32.mrf.mxu0
    %v2589 = vadd.f32 %v2540, %v2588
    %2590 = vdwg.mxu0
    %v2591 = vmax.f32 %v2552, 0.0
    %v2592 = vmax.f32 %v2554, 0.0
    %v2593 = vmax.f32 %v2557, 0.0
    %v2594 = vmax.f32 %v2559, 0.0
    %v2595 = vmax.f32 %v2562, 0.0
    %v2596 = vmax.f32 %v2564, 0.0
    %v2597 = vmax.f32 %v2567, 0.0
    %v2598 = vmax.f32 %v2569, 0.0
    %v2599 = vmax.f32 %v2572, 0.0
    %v2600 = vmax.f32 %v2574, 0.0
    %v2601 = vmax.f32 %v2577, 0.0
    %v2602 = vmax.f32 %v2579, 0.0
    %v2603 = vmax.f32 %v2582, 0.0
    %v2604 = vmax.f32 %v2584, 0.0
    %v2605 = vmax.f32 %v2587, 0.0
    %v2606 = vmax.f32 %v2589, 0.0
    %2607 = vst [vmem:[#allocation4] sm:$0xff] %v2591
    %2608 = vst [vmem:[#allocation4 + $0x8] sm:$0xff] %v2592
    %2609 = vst [vmem:[#allocation4 + $0x10] sm:$0xff] %v2593
    %2610 = vst [vmem:[#allocation4 + $0x18] sm:$0xff] %v2594
    %2611 = vst [vmem:[#allocation4 + $0x20] sm:$0xff] %v2595
    %2612 = vst [vmem:[#allocation4 + $0x28] sm:$0xff] %v2596
    %2613 = vst [vmem:[#allocation4 + $0x30] sm:$0xff] %v2597
    %2614 = vst [vmem:[#allocation4 + $0x38] sm:$0xff] %v2598
    %2615 = vst [vmem:[#allocation4 + $0x40] sm:$0xff] %v2599
    %2616 = vst [vmem:[#allocation4 + $0x48] sm:$0xff] %v2600
    %2617 = vst [vmem:[#allocation4 + $0x50] sm:$0xff] %v2601
    %2618 = vst [vmem:[#allocation4 + $0x58] sm:$0xff] %v2602
    %2619 = vst [vmem:[#allocation4 + $0x60] sm:$0xff] %v2603
    %2620 = vst [vmem:[#allocation4 + $0x68] sm:$0xff] %v2604
    %2621 = vst [vmem:[#allocation4 + $0x70] sm:$0xff] %v2605
    %2622 = vst [vmem:[#allocation4 + $0x78] sm:$0xff] %v2606
    // Predicated region
    $region69: #{tpu_custom_call.1} parent=1 // pred_check
      _
    $region70: #{tpu_custom_call.1} parent=1 // pred_check_branch
      %2624 = sbr.rel (0) target = $region72
    $region71: #{tpu_custom_call.1} parent=1 // pred_region
      %2626 = vsyncadd [#allocation5], 0
      %s2627 = sshll.u32 [#allocation4], 4
      %s2628 = int_to_ptr.vmem [resolvable:$true] %s2627
      %s2629 = sshll.u32 %s13, 4
      %s2630 = int_to_ptr.hbm [resolvable:$true] %s2629
      %2635 = dma.vmem_to_hbm [thread:$0]  %s2628, 2048, %s2630, [#allocation5], 128, 128, 8
    $region72: #{tpu_custom_call.1} parent=1 // pred_fallthru
      _
    // Predicated region
    $region73: #{tpu_custom_call.1} parent=1 // pred_check
      _
    $region74: #{tpu_custom_call.1} parent=1 // pred_check_branch
      %2637 = sbr.rel (0) target = $region76
    $region75: #{tpu_custom_call.1} parent=1 // pred_region
      %2639 = dma.done [#allocation5], 2048
    $region76: #{tpu_custom_call.1} parent=1 // pred_fallthru
      _
    %2640 = vsyncpa [#allocation5], 1
  %2641 = vsyncmov [#allocation3]
  %s2642 = vpop.sfrf %2641
  %p2643 = scmp.eq.s32.totalorder %s2642, 0
  %p2644 = pneg %p2643
  %2646 = shalt.err (%p2644)

</llo_original>
